<compile_context>
chip_gen: v7x
topology: tpu7x:2x2x1
jax: 0.10.0
libtpu: 0.0.40
codegen_flags: <defaults>
</compile_context>

<pallas_src>
import functools

import jax
import jax.numpy as jnp
from jax import lax
from jax.experimental import pallas as pl
from jax.experimental.pallas import tpu as pltpu


# ----------------------------------------------------------------------------
# small helpers (plain JAX glue: layout, padding, im2col, tile planning)
# ----------------------------------------------------------------------------
def _round_up(x, m):
    return (x + m - 1) // m * m


@functools.lru_cache(maxsize=None)
def _vmem_limit_bytes():
    # Generation-aware VMEM budget: ~75% of physical, capped at 96 MiB.
    # v5e/v6e -> 96 MiB of 128 MiB; v7x -> 48 MiB of its 64 MiB per-TC VMEM.
    cap = 128 * 1024 * 1024
    try:
        cap = int(getattr(pltpu.get_tpu_info(), "vmem_capacity_bytes", cap))
    except Exception:
        pass
    return int(min(96 * 1024 * 1024, (cap * 3) // 4))


def _choose_m_tiling(m):
    # Matmul row tile: multiple of 128 (whole (16,128) bf16 vregs / clean MXU passes).  When the
    # problem spans more than one tile, pad M so the tile count is even (feeds both v7x TCs).
    if m <= 512:
        tm = 128
    elif m <= 4096:
        tm = 256
    else:
        tm = 512
    mpad = tm if m <= tm else _round_up(m, 2 * tm)
    return tm, mpad


def _pick_tile_k(kpad):
    for tk in (512, 256, 128):
        if kpad % tk == 0:
            return tk
    return kpad  # kpad is always a multiple of 128, so unreachable


def _pick_tile_m_bn(mpad):
    # The elementwise pass gets its own, larger row tile (>=512 where divisible): measured HBM
    # roofline utilisation is much better at 512+ than at 128/256.
    for t in (512, 256, 128):
        if mpad % t == 0:
            return t
    return mpad


def _pad2d(a, rows, cols, dtype):
    r, c = a.shape
    return jnp.pad(a.astype(dtype), ((0, rows - r), (0, cols - c)))


def _weight_to_mat(w_oihw):
    # (Cout, Cin, kh, kw) -> (kh*kw*Cin, Cout), matching im2col's (dy, dx, ci) flattening order.
    o, i, kh, kw = w_oihw.shape
    return jnp.transpose(w_oihw, (2, 3, 1, 0)).reshape(kh * kw * i, o)


def _im2col(x_nhwc, ksize, stride, padding):
    # Built directly from bf16 activations so the dominant 9x patches intermediate is bf16.
    # TODO(synk): replace with in-kernel 9-tap shifted matmuls over the once-padded activation.
    n, h, w, c = x_nhwc.shape
    xp = jnp.pad(x_nhwc, ((0, 0), (padding, padding), (padding, padding), (0, 0)))
    ho = (h + 2 * padding - ksize) // stride + 1
    wo = (w + 2 * padding - ksize) // stride + 1
    cols = []
    for dy in range(ksize):
        for dx in range(ksize):
            cols.append(xp[:, dy:dy + ho * stride:stride, dx:dx + wo * stride:stride, :])
    patches = jnp.stack(cols, axis=3)                                # (N, Ho, Wo, k*k, C)
    return patches.reshape(n * ho * wo, ksize * ksize * c), (ho, wo)


# ----------------------------------------------------------------------------
# Pallas kernel 1: tiled conv-as-matmul (bf16 -> f32 acc -> bf16 y) + per-M-tile BN partial stats
# ----------------------------------------------------------------------------
def _matmul_stats_kernel(p_ref, w_ref, y_ref, s_ref, acc_ref, *, tk):
    # grid = (M_tiles, K_tiles); K is the trailing "arbitrary" reduction axis.
    # w_ref holds the FULL (kpad, cpad) weight matrix (VMEM-resident, DMA'd from HBM once).
    k = pl.program_id(1)

    @pl.when(k == 0)
    def _init():
        acc_ref[...] = jnp.zeros_like(acc_ref)

    off = pl.multiple_of(k * tk, tk)
    acc_ref[...] += jnp.dot(p_ref[...], w_ref[pl.ds(off, tk), :],
                            preferred_element_type=jnp.float32)

    @pl.when(k == pl.num_programs(1) - 1)
    def _finalize():
        acc = acc_ref[...]
        y_ref[...] = acc.astype(y_ref.dtype)
        # Per-channel partial stats from the f32 accumulator (padded rows are exactly zero).
        # Two masked row stores; remaining rows of the 8-row stats block are unused.
        s_ref[0:1, :] = jnp.sum(acc, axis=0, keepdims=True)
        s_ref[1:2, :] = jnp.sum(acc * acc, axis=0, keepdims=True)


def _conv_matmul_stats(patches_bf16, wmat_bf16, tm):
    mpad, kpad = patches_bf16.shape
    cpad = wmat_bf16.shape[1]
    mt = mpad // tm
    tk = _pick_tile_k(kpad)
    kt = kpad // tk
    cost = pl.CostEstimate(
        flops=2 * mpad * kpad * cpad,
        transcendentals=0,
        bytes_accessed=mpad * kpad * 2 + kpad * cpad * 2 + mpad * cpad * 2 + mt * 8 * cpad * 4)
    return pl.pallas_call(
        functools.partial(_matmul_stats_kernel, tk=tk),
        out_shape=(jax.ShapeDtypeStruct((mpad, cpad), jnp.bfloat16),
                   jax.ShapeDtypeStruct((mt * 8, cpad), jnp.float32)),
        grid_spec=pltpu.PrefetchScalarGridSpec(
            num_scalar_prefetch=0,
            grid=(mt, kt),
            in_specs=[pl.BlockSpec((tm, tk), lambda i, k: (i, k)),
                      pl.BlockSpec((kpad, cpad), lambda i, k: (0, 0))],   # W fully VMEM-resident
            out_specs=[pl.BlockSpec((tm, cpad), lambda i, k: (i, 0)),
                       pl.BlockSpec((8, cpad), lambda i, k: (i, 0))],
            scratch_shapes=[pltpu.VMEM((tm, cpad), jnp.float32)]),
        compiler_params=pltpu.CompilerParams(
            dimension_semantics=("parallel", "arbitrary"),
            vmem_limit_bytes=_vmem_limit_bytes()),
        cost_estimate=cost,
    )(patches_bf16, wmat_bf16)


# ----------------------------------------------------------------------------
# Pallas kernel 2: BN affine (y*scale + shift) + optional fused residual add + optional ReLU
#                  (bf16 streams, f32 math)
# ----------------------------------------------------------------------------
def _bn_affine_kernel(y_ref, sc_ref, sh_ref, o_ref, *, apply_relu):
    out = y_ref[...].astype(jnp.float32) * sc_ref[...] + sh_ref[...]
    if apply_relu:
        out = jnp.maximum(out, 0.0)
    o_ref[...] = out.astype(o_ref.dtype)


def _bn_affine_res_kernel(y_ref, sc_ref, sh_ref, r_ref, o_ref, *, apply_relu):
    out = (y_ref[...].astype(jnp.float32) * sc_ref[...] + sh_ref[...]
           + r_ref[...].astype(jnp.float32))
    if apply_relu:
        out = jnp.maximum(out, 0.0)
    o_ref[...] = out.astype(o_ref.dtype)


def _bn_affine(y, scale, shift, residual, apply_relu):
    mpad, cpad = y.shape
    tm = _pick_tile_m_bn(mpad)                 # decoupled from the matmul tile; prefer >=512
    mt = mpad // tm
    in_specs = [pl.BlockSpec((tm, cpad), lambda i: (i, 0)),
                pl.BlockSpec((1, cpad), lambda i: (0, 0)),
                pl.BlockSpec((1, cpad), lambda i: (0, 0))]
    args = [y, scale, shift]
    if residual is not None:
        kernel = functools.partial(_bn_affine_res_kernel, apply_relu=apply_relu)
        in_specs.append(pl.BlockSpec((tm, cpad), lambda i: (i, 0)))
        args.append(residual)
        nbytes = 3 * mpad * cpad * 2 + 2 * cpad * 4
    else:
        kernel = functools.partial(_bn_affine_kernel, apply_relu=apply_relu)
        nbytes = 2 * mpad * cpad * 2 + 2 * cpad * 4
    return pl.pallas_call(
        kernel,
        out_shape=jax.ShapeDtypeStruct((mpad, cpad), jnp.bfloat16),
        grid_spec=pltpu.PrefetchScalarGridSpec(
            num_scalar_prefetch=0,
            grid=(mt,),
            in_specs=in_specs,
            out_specs=pl.BlockSpec((tm, cpad), lambda i: (i, 0))),
        compiler_params=pltpu.CompilerParams(
            dimension_semantics=("parallel",),
            vmem_limit_bytes=_vmem_limit_bytes()),
        cost_estimate=pl.CostEstimate(flops=3 * mpad * cpad, transcendentals=0,
                                      bytes_accessed=nbytes),
    )(*args)


# ----------------------------------------------------------------------------
# conv + BN (training-mode batch stats) [+ residual] [+ ReLU]
# ----------------------------------------------------------------------------
def _conv_bn(patches_bf16, w_oihw, gamma, beta, *, tm, mpad, cpad,
             residual=None, apply_relu=False, eps=1e-5):
    m, k = patches_bf16.shape
    cout = w_oihw.shape[0]
    kpad = _round_up(k, 128)

    # bf16 MXU operands, zero-padded to lane/MXU-friendly 128 multiples (patches already bf16).
    p = jnp.pad(patches_bf16, ((0, mpad - m), (0, kpad - k)))
    w = _pad2d(_weight_to_mat(w_oihw), kpad, cpad, jnp.bfloat16)
    y, stats = _conv_matmul_stats(p, w, tm)

    # Finalize BN batch statistics in f32 from the per-M-tile partial sums (rows 0/1 of each
    # 8-row stats block).  Divide by the TRUE m so zero-padded rows do not bias mean/variance.
    # NOTE: single-pass biased variance E[y^2] - mean^2 in f32; fine at these magnitudes.
    s = stats.reshape(-1, 8, cpad)
    tot = jnp.sum(s[:, 0, :], axis=0)
    tot2 = jnp.sum(s[:, 1, :], axis=0)
    mean = tot / m
    var = jnp.maximum(tot2 / m - mean * mean, 0.0)
    g = jnp.pad(gamma.astype(jnp.float32), (0, cpad - cout))
    b = jnp.pad(beta.astype(jnp.float32), (0, cpad - cout))
    scale = g * lax.rsqrt(var + eps)
    shift = b - mean * scale

    return _bn_affine(y, scale.reshape(1, cpad), shift.reshape(1, cpad), residual, apply_relu)


# ----------------------------------------------------------------------------
# ResidualBlock and BlockGroup forward
# ----------------------------------------------------------------------------
def _residual_block(x_nhwc, params, first_stride):
    n, h, w, cin = x_nhwc.shape
    cout = params["w1"].shape[0]
    s = first_stride
    ho = (h + 2 - 3) // s + 1
    wo = (w + 2 - 3) // s + 1
    m = n * ho * wo
    tm, mpad = _choose_m_tiling(m)
    cpad = _round_up(cout, 128)

    # left branch, conv1 (3x3, stride=s, pad=1) + BN + ReLU  (no residual operand streamed)
    p1, _ = _im2col(x_nhwc, 3, s, 1)
    h1 = _conv_bn(p1, params["w1"], params["g1"], params["b1"],
                  tm=tm, mpad=mpad, cpad=cpad, residual=None, apply_relu=True)

    # right branch (bf16 residual, streamed only by the fused affine kernel)
    if s > 1:
        xs = x_nhwc[:, ::s, ::s, :].reshape(m, cin)                 # 1x1 conv, stride=s
        right = _conv_bn(xs, params["wr"], params["gr"], params["br"],
                         tm=tm, mpad=mpad, cpad=cpad, residual=None, apply_relu=False)
    else:
        right = _pad2d(x_nhwc.reshape(m, cin), mpad, cpad, jnp.bfloat16)  # identity

    # left branch, conv2 (3x3, stride=1, pad=1) + BN, fused residual add + ReLU
    h1_nhwc = h1[:m, :cout].reshape(n, ho, wo, cout)
    p2, _ = _im2col(h1_nhwc, 3, 1, 1)
    out = _conv_bn(p2, params["w2"], params["g2"], params["b2"],
                   tm=tm, mpad=mpad, cpad=cpad, residual=right, apply_relu=True)
    return out[:m, :cout].reshape(n, ho, wo, cout)


@functools.partial(jax.jit, static_argnames=("first_stride",))
def block_group_forward(x_nchw, params_list, first_stride):
    x = jnp.transpose(x_nchw, (0, 2, 3, 1)).astype(jnp.bfloat16)    # NCHW -> NHWC, bf16 streams
    for i, p in enumerate(params_list):
        x = _residual_block(x, p, first_stride if i == 0 else 1)
    return jnp.transpose(x, (0, 3, 1, 2)).astype(jnp.float32)       # NHWC -> NCHW


# ----------------------------------------------------------------------------
# Deterministic parameter init (mirrors the PyTorch modules' __init__)
# ----------------------------------------------------------------------------
def init_residual_block_params(key, in_feats, out_feats, first_stride):
    k1, k2, k3 = jax.random.split(key, 3)
    f1 = (1.0 / (in_feats * 9)) ** 0.5
    f2 = (1.0 / (out_feats * 9)) ** 0.5
    params = {
        "w1": jax.random.uniform(k1, (out_feats, in_feats, 3, 3), minval=-1.0, maxval=1.0) * f1,
        "w2": jax.random.uniform(k2, (out_feats, out_feats, 3, 3), minval=-1.0, maxval=1.0) * f2,
        "g1": jnp.ones(out_feats), "b1": jnp.zeros(out_feats),
        "g2": jnp.ones(out_feats), "b2": jnp.zeros(out_feats),
    }
    if first_stride > 1:
        fr = (1.0 / in_feats) ** 0.5
        params["wr"] = jax.random.uniform(k3, (out_feats, in_feats, 1, 1), minval=-1.0, maxval=1.0) * fr
        params["gr"] = jnp.ones(out_feats)
        params["br"] = jnp.zeros(out_feats)
    return params


def init_block_group_params(key, n_blocks, in_feats, out_feats, first_stride):
    keys = jax.random.split(key, n_blocks)
    params = [init_residual_block_params(keys[0], in_feats, out_feats, first_stride)]
    for i in range(1, n_blocks):
        params.append(init_residual_block_params(keys[i], out_feats, out_feats, 1))
    return params


# ----------------------------------------------------------------------------
# Pure-JAX reference (for correctness check)
# ----------------------------------------------------------------------------
def _conv_ref(x, w, stride, padding):
    return lax.conv_general_dilated(
        x, w, (stride, stride), [(padding, padding), (padding, padding)],
        dimension_numbers=("NCHW", "OIHW", "NCHW"), precision=lax.Precision.HIGHEST)


def _bn_ref(y, g, b, eps=1e-5):
    mean = jnp.mean(y, axis=(0, 2, 3), keepdims=True)
    var = jnp.mean((y - mean) ** 2, axis=(0, 2, 3), keepdims=True)
    return (y - mean) / jnp.sqrt(var + eps) * g.reshape(1, -1, 1, 1) + b.reshape(1, -1, 1, 1)


def _residual_block_ref(x, params, first_stride):
    h = _conv_ref(x, params["w1"], first_stride, 1)
    h = jnp.maximum(_bn_ref(h, params["g1"], params["b1"]), 0.0)
    h = _conv_ref(h, params["w2"], 1, 1)
    h = _bn_ref(h, params["g2"], params["b2"])
    if first_stride > 1:
        r = _bn_ref(_conv_ref(x, params["wr"], first_stride, 0), params["gr"], params["br"])
    else:
        r = x
    return jnp.maximum(h + r, 0.0)


def block_group_ref(x, params_list, first_stride):
    for i, p in enumerate(params_list):
        x = _residual_block_ref(x, p, first_stride if i == 0 else 1)
    return x


if __name__ == "__main__":
    key = jax.random.PRNGKey(0)
    kx, kp_a, kp_b = jax.random.split(key, 3)
    x = jax.random.normal(kx, (2, 4, 16, 16), dtype=jnp.float32)

    # Tolerance reflects bf16 activations/intermediates (f32 accumulation and BN statistics)
    # chained through two residual blocks.
    TOL = 1e-1

    # 1) BlockGroup(n_blocks=2, in_feats=4, out_feats=8, first_stride=2)  (downsampling + identity)
    params_a = init_block_group_params(kp_a, 2, 4, 8, 2)
    out_a = jax.block_until_ready(block_group_forward(x, params_a, first_stride=2))
    ref_a = block_group_ref(x, params_a, 2)
    assert out_a.shape == (2, 8, 8, 8), out_a.shape
    assert jnp.allclose(out_a, ref_a, atol=TOL, rtol=TOL), float(jnp.max(jnp.abs(out_a - ref_a)))

    # 2) BlockGroup(n_blocks=2, in_feats=out_feats=4, first_stride=1)  (pure identity-residual path)
    params_b = init_block_group_params(kp_b, 2, 4, 4, 1)
    out_b = jax.block_until_ready(block_group_forward(x, params_b, first_stride=1))
    ref_b = block_group_ref(x, params_b, 1)
    assert out_b.shape == (2, 4, 16, 16), out_b.shape
    assert jnp.allclose(out_b, ref_b, atol=TOL, rtol=TOL), float(jnp.max(jnp.abs(out_b - ref_b)))

    print("KERNEL_OK")
</pallas_src>

<mosaic_0001>
module attributes {stable_mosaic.version = 11 : i64} {
  func.func @_bn_affine_kernel(%arg0: i32, %arg1: memref<128x128xbf16, #tpu.memory_space<vmem>>, %arg2: memref<1x128xf32, #tpu.memory_space<vmem>>, %arg3: memref<1x128xf32, #tpu.memory_space<vmem>>, %arg4: memref<128x128xbf16, #tpu.memory_space<vmem>>) attributes {dimension_semantics = [#tpu.dimension_semantics<parallel>], iteration_bounds = array<i64: 1>, scalar_prefetch = 0 : i64, scratch_operands = 0 : i64, tpu.core_type = #tpu.core_type<tc>, window_params = [{transform_indices = @transform_0, window_bounds = array<i64: 128, 128>}, {pipeline_mode = #tpu.pipeline_mode<synchronous>, transform_indices = @transform_1, window_bounds = array<i64: 1, 128>}, {pipeline_mode = #tpu.pipeline_mode<synchronous>, transform_indices = @transform_2, window_bounds = array<i64: 1, 128>}, {transform_indices = @transform_3, window_bounds = array<i64: 128, 128>}]} {
    %c0 = arith.constant 0 : index
    %c0_0 = arith.constant 0 : index
    %0 = vector.load %arg1[%c0, %c0_0] : memref<128x128xbf16, #tpu.memory_space<vmem>>, vector<128x128xbf16>
    %1 = arith.extf %0 : vector<128x128xbf16> to vector<128x128xf32>
    %c0_1 = arith.constant 0 : index
    %c0_2 = arith.constant 0 : index
    %2 = vector.load %arg2[%c0_1, %c0_2] : memref<1x128xf32, #tpu.memory_space<vmem>>, vector<1x128xf32>
    %3 = vector.broadcast %2 : vector<1x128xf32> to vector<128x128xf32>
    %4 = arith.mulf %1, %3 : vector<128x128xf32>
    %c0_3 = arith.constant 0 : index
    %c0_4 = arith.constant 0 : index
    %5 = vector.load %arg3[%c0_3, %c0_4] : memref<1x128xf32, #tpu.memory_space<vmem>>, vector<1x128xf32>
    %6 = vector.broadcast %5 : vector<1x128xf32> to vector<128x128xf32>
    %7 = arith.addf %4, %6 : vector<128x128xf32>
    %cst = arith.constant 0.000000e+00 : f32
    %8 = vector.broadcast %cst : f32 to vector<128x128xf32>
    %9 = arith.maximumf %7, %8 : vector<128x128xf32>
    %10 = arith.truncf %9 : vector<128x128xf32> to vector<128x128xbf16>
    %c0_5 = arith.constant 0 : index
    %c0_6 = arith.constant 0 : index
    %11 = vector.load %arg4[%c0_5, %c0_6] : memref<128x128xbf16, #tpu.memory_space<vmem>>, vector<128x128xbf16>
    tpu.vector_store %arg4[%c0_5, %c0_6], %10 {strides = array<i32>} : memref<128x128xbf16, #tpu.memory_space<vmem>>, vector<128x128xbf16>,
    return
  }
  func.func @transform_0(%arg0: i32) -> (i32, i32) {
    %c0_i32 = arith.constant 0 : i32
    %c0_i32_0 = arith.constant 0 : i32
    return %arg0, %c0_i32 : i32, i32
  }
  func.func @transform_1(%arg0: i32) -> (i32, i32) {
    %c0_i32 = arith.constant 0 : i32
    %c0_i32_0 = arith.constant 0 : i32
    %c0_i32_1 = arith.constant 0 : i32
    return %c0_i32, %c0_i32_0 : i32, i32
  }
  func.func @transform_2(%arg0: i32) -> (i32, i32) {
    %c0_i32 = arith.constant 0 : i32
    %c0_i32_0 = arith.constant 0 : i32
    %c0_i32_1 = arith.constant 0 : i32
    return %c0_i32, %c0_i32_0 : i32, i32
  }
  func.func @transform_3(%arg0: i32) -> (i32, i32) {
    %c0_i32 = arith.constant 0 : i32
    %c0_i32_0 = arith.constant 0 : i32
    return %arg0, %c0_i32 : i32, i32
  }
}

module attributes {stable_mosaic.version = 11 : i64} {
  func.func @_matmul_stats_kernel(%arg0: i32, %arg1: i32, %arg2: memref<128x128xbf16, #tpu.memory_space<vmem>>, %arg3: memref<128x128xbf16, #tpu.memory_space<vmem>>, %arg4: memref<128x128xbf16, #tpu.memory_space<vmem>>, %arg5: memref<8x128xf32, #tpu.memory_space<vmem>>, %arg6: memref<128x128xf32, #tpu.memory_space<vmem>>) attributes {dimension_semantics = [#tpu.dimension_semantics<parallel>, #tpu.dimension_semantics<arbitrary>], iteration_bounds = array<i64: 1, 1>, scalar_prefetch = 0 : i64, scratch_operands = 1 : i64, tpu.core_type = #tpu.core_type<tc>, window_params = [{transform_indices = @transform_0, window_bounds = array<i64: 128, 128>}, {pipeline_mode = #tpu.pipeline_mode<synchronous>, transform_indices = @transform_1, window_bounds = array<i64: 128, 128>}, {transform_indices = @transform_2, window_bounds = array<i64: 128, 128>}, {transform_indices = @transform_3, window_bounds = array<i64: 8, 128>}]} {
    %c0_i32 = arith.constant 0 : i32
    %0 = arith.cmpi eq, %arg1, %c0_i32 : i32
    %1 = arith.extui %0 : i1 to i32
    %c0_i32_0 = arith.constant 0 : i32
    %2 = arith.cmpi ne, %1, %c0_i32_0 : i32
    scf.if %2 {
      %cst_9 = arith.constant 0.000000e+00 : f32
      %15 = vector.broadcast %cst_9 : f32 to vector<128x128xf32>
      %c0_10 = arith.constant 0 : index
      %c0_11 = arith.constant 0 : index
      %16 = vector.load %arg6[%c0_10, %c0_11] : memref<128x128xf32, #tpu.memory_space<vmem>>, vector<128x128xf32>
      tpu.vector_store %arg6[%c0_10, %c0_11], %15 {strides = array<i32>} : memref<128x128xf32, #tpu.memory_space<vmem>>, vector<128x128xf32>,
    } else {
    }
    %c128_i32 = arith.constant 128 : i32
    %3 = arith.muli %arg1, %c128_i32 : i32
    %4 = tpu.assume_multiple %3, 128 : i32
    %c0 = arith.constant 0 : index
    %c0_1 = arith.constant 0 : index
    %5 = vector.load %arg6[%c0, %c0_1] : memref<128x128xf32, #tpu.memory_space<vmem>>, vector<128x128xf32>
    %c0_2 = arith.constant 0 : index
    %c0_3 = arith.constant 0 : index
    %6 = vector.load %arg2[%c0_2, %c0_3] : memref<128x128xbf16, #tpu.memory_space<vmem>>, vector<128x128xbf16>
    %7 = arith.index_cast %4 : i32 to index
    %c0_4 = arith.constant 0 : index
    %8 = vector.load %arg3[%7, %c0_4] : memref<128x128xbf16, #tpu.memory_space<vmem>>, vector<128x128xbf16>
    %cst = arith.constant dense<0.000000e+00> : vector<128x128xf32>
    %9 = tpu.matmul %6, %8, %cst {dimension_numbers = #tpu.dot_dimension_numbers<[1], [0], [0], [1], [0, 0, 1, 1], [], []>} : vector<128x128xbf16>, vector<128x128xbf16>, vector<128x128xf32> -> vector<128x128xf32>
    %10 = arith.addf %5, %9 : vector<128x128xf32>
    %c0_5 = arith.constant 0 : index
    %c0_6 = arith.constant 0 : index
    %11 = vector.load %arg6[%c0_5, %c0_6] : memref<128x128xf32, #tpu.memory_space<vmem>>, vector<128x128xf32>
    tpu.vector_store %arg6[%c0_5, %c0_6], %10 {strides = array<i32>} : memref<128x128xf32, #tpu.memory_space<vmem>>, vector<128x128xf32>,
    %c0_i32_7 = arith.constant 0 : i32
    %12 = arith.cmpi eq, %arg1, %c0_i32_7 : i32
    %13 = arith.extui %12 : i1 to i32
    %c0_i32_8 = arith.constant 0 : i32
    %14 = arith.cmpi ne, %13, %c0_i32_8 : i32
    scf.if %14 {
      %c0_9 = arith.constant 0 : index
      %c0_10 = arith.constant 0 : index
      %15 = vector.load %arg6[%c0_9, %c0_10] : memref<128x128xf32, #tpu.memory_space<vmem>>, vector<128x128xf32>
      %16 = arith.truncf %15 : vector<128x128xf32> to vector<128x128xbf16>
      %c0_11 = arith.constant 0 : index
      %c0_12 = arith.constant 0 : index
      %17 = vector.load %arg4[%c0_11, %c0_12] : memref<128x128xbf16, #tpu.memory_space<vmem>>, vector<128x128xbf16>
      tpu.vector_store %arg4[%c0_11, %c0_12], %16 {strides = array<i32>} : memref<128x128xbf16, #tpu.memory_space<vmem>>, vector<128x128xbf16>,
      %cst_13 = arith.constant dense<0.000000e+00> : vector<128xf32>
      %18 = vector.multi_reduction <add>, %15, %cst_13 [0] : vector<128x128xf32> to vector<128xf32>
      %19 = vector.shape_cast %18 : vector<128xf32> to vector<1x128xf32>
      %c0_14 = arith.constant 0 : index
      %c0_15 = arith.constant 0 : index
      %20 = vector.load %arg5[%c0_14, %c0_15] : memref<8x128xf32, #tpu.memory_space<vmem>>, vector<1x128xf32>
      tpu.vector_store %arg5[%c0_14, %c0_15], %19 {strides = array<i32>} : memref<8x128xf32, #tpu.memory_space<vmem>>, vector<1x128xf32>,
      %21 = arith.mulf %15, %15 : vector<128x128xf32>
      %cst_16 = arith.constant dense<0.000000e+00> : vector<128xf32>
      %22 = vector.multi_reduction <add>, %21, %cst_16 [0] : vector<128x128xf32> to vector<128xf32>
      %23 = vector.shape_cast %22 : vector<128xf32> to vector<1x128xf32>
      %c1 = arith.constant 1 : index
      %c0_17 = arith.constant 0 : index
      %24 = vector.load %arg5[%c1, %c0_17] : memref<8x128xf32, #tpu.memory_space<vmem>>, vector<1x128xf32>
      tpu.vector_store %arg5[%c1, %c0_17], %23 {strides = array<i32>} : memref<8x128xf32, #tpu.memory_space<vmem>>, vector<1x128xf32>,
    } else {
    }
    return
  }
  func.func @transform_0(%arg0: i32, %arg1: i32) -> (i32, i32) {
    %c0_i32 = arith.constant 0 : i32
    return %arg0, %arg1 : i32, i32
  }
  func.func @transform_1(%arg0: i32, %arg1: i32) -> (i32, i32) {
    %c0_i32 = arith.constant 0 : i32
    %c0_i32_0 = arith.constant 0 : i32
    %c0_i32_1 = arith.constant 0 : i32
    return %c0_i32, %c0_i32_0 : i32, i32
  }
  func.func @transform_2(%arg0: i32, %arg1: i32) -> (i32, i32) {
    %c0_i32 = arith.constant 0 : i32
    %c0_i32_0 = arith.constant 0 : i32
    return %arg0, %c0_i32 : i32, i32
  }
  func.func @transform_3(%arg0: i32, %arg1: i32) -> (i32, i32) {
    %c0_i32 = arith.constant 0 : i32
    %c0_i32_0 = arith.constant 0 : i32
    return %arg0, %c0_i32 : i32, i32
  }
}

module attributes {stable_mosaic.version = 11 : i64} {
  func.func @_bn_affine_kernel(%arg0: i32, %arg1: memref<128x128xbf16, #tpu.memory_space<vmem>>, %arg2: memref<1x128xf32, #tpu.memory_space<vmem>>, %arg3: memref<1x128xf32, #tpu.memory_space<vmem>>, %arg4: memref<128x128xbf16, #tpu.memory_space<vmem>>) attributes {dimension_semantics = [#tpu.dimension_semantics<parallel>], iteration_bounds = array<i64: 1>, scalar_prefetch = 0 : i64, scratch_operands = 0 : i64, tpu.core_type = #tpu.core_type<tc>, window_params = [{transform_indices = @transform_0, window_bounds = array<i64: 128, 128>}, {pipeline_mode = #tpu.pipeline_mode<synchronous>, transform_indices = @transform_1, window_bounds = array<i64: 1, 128>}, {pipeline_mode = #tpu.pipeline_mode<synchronous>, transform_indices = @transform_2, window_bounds = array<i64: 1, 128>}, {transform_indices = @transform_3, window_bounds = array<i64: 128, 128>}]} {
    %c0 = arith.constant 0 : index
    %c0_0 = arith.constant 0 : index
    %0 = vector.load %arg1[%c0, %c0_0] : memref<128x128xbf16, #tpu.memory_space<vmem>>, vector<128x128xbf16>
    %1 = arith.extf %0 : vector<128x128xbf16> to vector<128x128xf32>
    %c0_1 = arith.constant 0 : index
    %c0_2 = arith.constant 0 : index
    %2 = vector.load %arg2[%c0_1, %c0_2] : memref<1x128xf32, #tpu.memory_space<vmem>>, vector<1x128xf32>
    %3 = vector.broadcast %2 : vector<1x128xf32> to vector<128x128xf32>
    %4 = arith.mulf %1, %3 : vector<128x128xf32>
    %c0_3 = arith.constant 0 : index
    %c0_4 = arith.constant 0 : index
    %5 = vector.load %arg3[%c0_3, %c0_4] : memref<1x128xf32, #tpu.memory_space<vmem>>, vector<1x128xf32>
    %6 = vector.broadcast %5 : vector<1x128xf32> to vector<128x128xf32>
    %7 = arith.addf %4, %6 : vector<128x128xf32>
    %8 = arith.truncf %7 : vector<128x128xf32> to vector<128x128xbf16>
    %c0_5 = arith.constant 0 : index
    %c0_6 = arith.constant 0 : index
    %9 = vector.load %arg4[%c0_5, %c0_6] : memref<128x128xbf16, #tpu.memory_space<vmem>>, vector<128x128xbf16>
    tpu.vector_store %arg4[%c0_5, %c0_6], %8 {strides = array<i32>} : memref<128x128xbf16, #tpu.memory_space<vmem>>, vector<128x128xbf16>,
    return
  }
  func.func @transform_0(%arg0: i32) -> (i32, i32) {
    %c0_i32 = arith.constant 0 : i32
    %c0_i32_0 = arith.constant 0 : i32
    return %arg0, %c0_i32 : i32, i32
  }
  func.func @transform_1(%arg0: i32) -> (i32, i32) {
    %c0_i32 = arith.constant 0 : i32
    %c0_i32_0 = arith.constant 0 : i32
    %c0_i32_1 = arith.constant 0 : i32
    return %c0_i32, %c0_i32_0 : i32, i32
  }
  func.func @transform_2(%arg0: i32) -> (i32, i32) {
    %c0_i32 = arith.constant 0 : i32
    %c0_i32_0 = arith.constant 0 : i32
    %c0_i32_1 = arith.constant 0 : i32
    return %c0_i32, %c0_i32_0 : i32, i32
  }
  func.func @transform_3(%arg0: i32) -> (i32, i32) {
    %c0_i32 = arith.constant 0 : i32
    %c0_i32_0 = arith.constant 0 : i32
    return %arg0, %c0_i32 : i32, i32
  }
}

module attributes {stable_mosaic.version = 11 : i64} {
  func.func @_bn_affine_res_kernel(%arg0: i32, %arg1: memref<128x128xbf16, #tpu.memory_space<vmem>>, %arg2: memref<1x128xf32, #tpu.memory_space<vmem>>, %arg3: memref<1x128xf32, #tpu.memory_space<vmem>>, %arg4: memref<128x128xbf16, #tpu.memory_space<vmem>>, %arg5: memref<128x128xbf16, #tpu.memory_space<vmem>>) attributes {dimension_semantics = [#tpu.dimension_semantics<parallel>], iteration_bounds = array<i64: 1>, scalar_prefetch = 0 : i64, scratch_operands = 0 : i64, tpu.core_type = #tpu.core_type<tc>, window_params = [{transform_indices = @transform_0, window_bounds = array<i64: 128, 128>}, {pipeline_mode = #tpu.pipeline_mode<synchronous>, transform_indices = @transform_1, window_bounds = array<i64: 1, 128>}, {pipeline_mode = #tpu.pipeline_mode<synchronous>, transform_indices = @transform_2, window_bounds = array<i64: 1, 128>}, {transform_indices = @transform_3, window_bounds = array<i64: 128, 128>}, {transform_indices = @transform_4, window_bounds = array<i64: 128, 128>}]} {
    %c0 = arith.constant 0 : index
    %c0_0 = arith.constant 0 : index
    %0 = vector.load %arg1[%c0, %c0_0] : memref<128x128xbf16, #tpu.memory_space<vmem>>, vector<128x128xbf16>
    %1 = arith.extf %0 : vector<128x128xbf16> to vector<128x128xf32>
    %c0_1 = arith.constant 0 : index
    %c0_2 = arith.constant 0 : index
    %2 = vector.load %arg2[%c0_1, %c0_2] : memref<1x128xf32, #tpu.memory_space<vmem>>, vector<1x128xf32>
    %3 = vector.broadcast %2 : vector<1x128xf32> to vector<128x128xf32>
    %4 = arith.mulf %1, %3 : vector<128x128xf32>
    %c0_3 = arith.constant 0 : index
    %c0_4 = arith.constant 0 : index
    %5 = vector.load %arg3[%c0_3, %c0_4] : memref<1x128xf32, #tpu.memory_space<vmem>>, vector<1x128xf32>
    %6 = vector.broadcast %5 : vector<1x128xf32> to vector<128x128xf32>
    %7 = arith.addf %4, %6 : vector<128x128xf32>
    %c0_5 = arith.constant 0 : index
    %c0_6 = arith.constant 0 : index
    %8 = vector.load %arg4[%c0_5, %c0_6] : memref<128x128xbf16, #tpu.memory_space<vmem>>, vector<128x128xbf16>
    %9 = arith.extf %8 : vector<128x128xbf16> to vector<128x128xf32>
    %10 = arith.addf %7, %9 : vector<128x128xf32>
    %cst = arith.constant 0.000000e+00 : f32
    %11 = vector.broadcast %cst : f32 to vector<128x128xf32>
    %12 = arith.maximumf %10, %11 : vector<128x128xf32>
    %13 = arith.truncf %12 : vector<128x128xf32> to vector<128x128xbf16>
    %c0_7 = arith.constant 0 : index
    %c0_8 = arith.constant 0 : index
    %14 = vector.load %arg5[%c0_7, %c0_8] : memref<128x128xbf16, #tpu.memory_space<vmem>>, vector<128x128xbf16>
    tpu.vector_store %arg5[%c0_7, %c0_8], %13 {strides = array<i32>} : memref<128x128xbf16, #tpu.memory_space<vmem>>, vector<128x128xbf16>,
    return
  }
  func.func @transform_0(%arg0: i32) -> (i32, i32) {
    %c0_i32 = arith.constant 0 : i32
    %c0_i32_0 = arith.constant 0 : i32
    return %arg0, %c0_i32 : i32, i32
  }
  func.func @transform_1(%arg0: i32) -> (i32, i32) {
    %c0_i32 = arith.constant 0 : i32
    %c0_i32_0 = arith.constant 0 : i32
    %c0_i32_1 = arith.constant 0 : i32
    return %c0_i32, %c0_i32_0 : i32, i32
  }
  func.func @transform_2(%arg0: i32) -> (i32, i32) {
    %c0_i32 = arith.constant 0 : i32
    %c0_i32_0 = arith.constant 0 : i32
    %c0_i32_1 = arith.constant 0 : i32
    return %c0_i32, %c0_i32_0 : i32, i32
  }
  func.func @transform_3(%arg0: i32) -> (i32, i32) {
    %c0_i32 = arith.constant 0 : i32
    %c0_i32_0 = arith.constant 0 : i32
    return %arg0, %c0_i32 : i32, i32
  }
  func.func @transform_4(%arg0: i32) -> (i32, i32) {
    %c0_i32 = arith.constant 0 : i32
    %c0_i32_0 = arith.constant 0 : i32
    return %arg0, %c0_i32 : i32, i32
  }
}

</mosaic_0001>

<llo_original>
// kernel: block_group_forward.11
$region0: #{block_group_forward.11}
  #allocation0 [shape = 'u32[]', space=smem, size = 0x4, offset = 0x4, fixed_abs, tag = 'smem constant byte address 0x4 - core index']
  #allocation1 [shape = 'u32[144,128]{1,0:T(1,128)}', space=vmem, size = 0x12000, scoped, tag = 'internal scratch']
  %s0 = inlined_call_operand.hbm [shape: bf16[128,128], index: 0, kind: input, shape index: {}]
  %s1 = inlined_call_operand.hbm [shape: f32[1,128], index: 1, kind: input, shape index: {}]
  %s2 = inlined_call_operand.hbm [shape: f32[1,128], index: 2, kind: input, shape index: {}]
  %s3 = inlined_call_operand.hbm [shape: bf16[128,128], index: 3, kind: output, shape index: {}]
  %s4 = sld [smem:[#allocation0]]
  $region34: #{block_group_forward.11} parent=0
    _
  %s6 = ssub.s32 1, %s4
  %s7 = scalar_select 0, %s6, %s4
  $region1: #{block_group_forward.11} parent=0
    #allocation2 [shape = 'u8[32768]{0}', space=vmem, size = 0x8000, scoped, tag = 'input window, operand 0, single buffered']
    #allocation3 [shape = 's32[1]{0}', space=sflag, size = 0x4, scoped, tag = 'scoped memory for block_group_forward.11']
    #allocation4 [shape = 's32[1]{0}', space=sflag, size = 0x4, scoped, tag = 'scoped memory for block_group_forward.11']
    #allocation5 [shape = 'u8[512]{0}', space=vmem, size = 0x400, scoped, tag = 'input window, operand 1, single buffered']
    #allocation6 [shape = 's32[1]{0}', space=sflag, size = 0x4, scoped, tag = 'scoped memory for block_group_forward.11']
    #allocation7 [shape = 'u8[512]{0}', space=vmem, size = 0x400, scoped, tag = 'input window, operand 2, single buffered']
    #allocation8 [shape = 'u8[32768]{0}', space=vmem, size = 0x8000, scoped, tag = 'output window, operand 0, single buffered']
    %8 = vsyncpa [#allocation3], 0
    %9 = vsyncpa [#allocation6], 0
    %10 = vsyncpa [#allocation4], 0
    // Predicated region
    $region2: #{block_group_forward.11} parent=1 // pred_check
      _
    $region3: #{block_group_forward.11} parent=1 // pred_check_branch
      %12 = sbr.rel (0) target = $region5
    $region4: #{block_group_forward.11} parent=1 // pred_region
      %s14 = ssub.s32 1024, 1024
      %15 = vsyncadd [#allocation3], %s14
      %s16 = sshll.u32 [#allocation2], 4
      %s17 = int_to_ptr.vmem [resolvable:$true] %s16
      %22 = dma.hbm_to_vmem [thread:$0]  %s0, 1024, %s17, [#allocation3], 64, 64, 4
    $region5: #{block_group_forward.11} parent=1 // pred_fallthru
      _
    // Predicated region
    $region6: #{block_group_forward.11} parent=1 // pred_check
      _
    $region7: #{block_group_forward.11} parent=1 // pred_check_branch
      %24 = sbr.rel (0) target = $region9
    $region8: #{block_group_forward.11} parent=1 // pred_region
      %s26 = ssub.s32 16, 16
      %27 = vsyncadd [#allocation6], %s26
      %s29 = sshll.u32 [#allocation5], 4
      %s30 = int_to_ptr.vmem [resolvable:$true] %s29
      %32 = dma.hbm_to_vmem [thread:$0]  %s1, 16, %s30, [#allocation6]
    $region9: #{block_group_forward.11} parent=1 // pred_fallthru
      _
    // Predicated region
    $region10: #{block_group_forward.11} parent=1 // pred_check
      _
    $region11: #{block_group_forward.11} parent=1 // pred_check_branch
      %34 = sbr.rel (0) target = $region13
    $region12: #{block_group_forward.11} parent=1 // pred_region
      %s36 = ssub.s32 16, 16
      %37 = vsyncadd [#allocation6], %s36
      %s39 = sshll.u32 [#allocation7], 4
      %s40 = int_to_ptr.vmem [resolvable:$true] %s39
      %42 = dma.hbm_to_vmem [thread:$0]  %s2, 16, %s40, [#allocation6]
    $region13: #{block_group_forward.11} parent=1 // pred_fallthru
      _
    // Predicated region
    $region14: #{block_group_forward.11} parent=1 // pred_check
      _
    $region15: #{block_group_forward.11} parent=1 // pred_check_branch
      %44 = sbr.rel (0) target = $region17
    $region16: #{block_group_forward.11} parent=1 // pred_region
      %45 = dma.done [#allocation3], 1024
    $region17: #{block_group_forward.11} parent=1 // pred_fallthru
      _
    // Predicated region
    $region18: #{block_group_forward.11} parent=1 // pred_check
      _
    $region19: #{block_group_forward.11} parent=1 // pred_check_branch
      %47 = sbr.rel (0) target = $region21
    $region20: #{block_group_forward.11} parent=1 // pred_region
      %48 = dma.done [#allocation6], 16
    $region21: #{block_group_forward.11} parent=1 // pred_fallthru
      _
    // Predicated region
    $region22: #{block_group_forward.11} parent=1 // pred_check
      _
    $region23: #{block_group_forward.11} parent=1 // pred_check_branch
      %50 = sbr.rel (0) target = $region25
    $region24: #{block_group_forward.11} parent=1 // pred_region
      %51 = dma.done [#allocation6], 16
    $region25: #{block_group_forward.11} parent=1 // pred_fallthru
      _
    %v52 = vld [vmem:[#allocation2] sm:$0xf]
    %v53 = vld [vmem:[#allocation2 + $0x4] sm:$0xf]
    %v54 = vld [vmem:[#allocation2 + $0x8] sm:$0xf]
    %v55 = vld [vmem:[#allocation2 + $0xc] sm:$0xf]
    %v56 = vld [vmem:[#allocation2 + $0x10] sm:$0xf]
    %v57 = vld [vmem:[#allocation2 + $0x14] sm:$0xf]
    %v58 = vld [vmem:[#allocation2 + $0x18] sm:$0xf]
    %v59 = vld [vmem:[#allocation2 + $0x1c] sm:$0xf]
    %v60 = vld [vmem:[#allocation2 + $0x20] sm:$0xf]
    %v61 = vld [vmem:[#allocation2 + $0x24] sm:$0xf]
    %v62 = vld [vmem:[#allocation2 + $0x28] sm:$0xf]
    %v63 = vld [vmem:[#allocation2 + $0x2c] sm:$0xf]
    %v64 = vld [vmem:[#allocation2 + $0x30] sm:$0xf]
    %v65 = vld [vmem:[#allocation2 + $0x34] sm:$0xf]
    %v66 = vld [vmem:[#allocation2 + $0x38] sm:$0xf]
    %v67 = vld [vmem:[#allocation2 + $0x3c] sm:$0xf]
    %v68 = vunpack.c.l.bf16 %v52
    %v69 = vunpack.c.l.bf16 %v53
    %v70 = vunpack.c.l.bf16 %v54
    %v71 = vunpack.c.l.bf16 %v55
    %v72 = vunpack.c.l.bf16 %v56
    %v73 = vunpack.c.l.bf16 %v57
    %v74 = vunpack.c.l.bf16 %v58
    %v75 = vunpack.c.l.bf16 %v59
    %v76 = vunpack.c.l.bf16 %v60
    %v77 = vunpack.c.l.bf16 %v61
    %v78 = vunpack.c.l.bf16 %v62
    %v79 = vunpack.c.l.bf16 %v63
    %v80 = vunpack.c.l.bf16 %v64
    %v81 = vunpack.c.l.bf16 %v65
    %v82 = vunpack.c.l.bf16 %v66
    %v83 = vunpack.c.l.bf16 %v67
    %v84 = vld [vmem:[#allocation5] sm:$0x1]
    %v86 = vlaneseq
    %v87 = vshrl.u32 %v86, 7
    %v88 = vsub.s32 0, %v87
    %v89 = vrot.slane %v84, %v88
    %v91 = vmul.f32 %v68, %v89
    %v92 = vmul.f32 %v69, %v89
    %v93 = vmul.f32 %v70, %v89
    %v94 = vmul.f32 %v71, %v89
    %v95 = vmul.f32 %v72, %v89
    %v96 = vmul.f32 %v73, %v89
    %v97 = vmul.f32 %v74, %v89
    %v98 = vmul.f32 %v75, %v89
    %v99 = vmul.f32 %v76, %v89
    %v100 = vmul.f32 %v77, %v89
    %v101 = vmul.f32 %v78, %v89
    %v102 = vmul.f32 %v79, %v89
    %v103 = vmul.f32 %v80, %v89
    %v104 = vmul.f32 %v81, %v89
    %v105 = vmul.f32 %v82, %v89
    %v106 = vmul.f32 %v83, %v89
    %v107 = vld [vmem:[#allocation7] sm:$0x1]
    %v109 = vlaneseq
    %v110 = vshrl.u32 %v109, 7
    %v111 = vsub.s32 0, %v110
    %v112 = vrot.slane %v107, %v111
    %v114 = vadd.f32 %v91, %v112
    %v115 = vadd.f32 %v92, %v112
    %v116 = vadd.f32 %v93, %v112
    %v117 = vadd.f32 %v94, %v112
    %v118 = vadd.f32 %v95, %v112
    %v119 = vadd.f32 %v96, %v112
    %v120 = vadd.f32 %v97, %v112
    %v121 = vadd.f32 %v98, %v112
    %v122 = vadd.f32 %v99, %v112
    %v123 = vadd.f32 %v100, %v112
    %v124 = vadd.f32 %v101, %v112
    %v125 = vadd.f32 %v102, %v112
    %v126 = vadd.f32 %v103, %v112
    %v127 = vadd.f32 %v104, %v112
    %v128 = vadd.f32 %v105, %v112
    %v129 = vadd.f32 %v106, %v112
    %v130 = vmax.f32 %v114, 0.0
    %v131 = vmax.f32 %v115, 0.0
    %v132 = vmax.f32 %v116, 0.0
    %v133 = vmax.f32 %v117, 0.0
    %v134 = vmax.f32 %v118, 0.0
    %v135 = vmax.f32 %v119, 0.0
    %v136 = vmax.f32 %v120, 0.0
    %v137 = vmax.f32 %v121, 0.0
    %v138 = vmax.f32 %v122, 0.0
    %v139 = vmax.f32 %v123, 0.0
    %v140 = vmax.f32 %v124, 0.0
    %v141 = vmax.f32 %v125, 0.0
    %v142 = vmax.f32 %v126, 0.0
    %v143 = vmax.f32 %v127, 0.0
    %v144 = vmax.f32 %v128, 0.0
    %v145 = vmax.f32 %v129, 0.0
    %v146 = vpack.c.bf16 %v131, %v130
    %v147 = vpack.c.bf16 %v133, %v132
    %v148 = vpack.c.bf16 %v135, %v134
    %v149 = vpack.c.bf16 %v137, %v136
    %v150 = vpack.c.bf16 %v139, %v138
    %v151 = vpack.c.bf16 %v141, %v140
    %v152 = vpack.c.bf16 %v143, %v142
    %v153 = vpack.c.bf16 %v145, %v144
    %v162 = vunpack.c.l.b16 %v146
    %v163 = vunpack.c.h.b16 %v146
    %v164 = vunpack.c.l.b16 %v147
    %v165 = vunpack.c.h.b16 %v147
    %v166 = vunpack.c.l.b16 %v148
    %v167 = vunpack.c.h.b16 %v148
    %v168 = vunpack.c.l.b16 %v149
    %v169 = vunpack.c.h.b16 %v149
    %v170 = vunpack.c.l.b16 %v150
    %v171 = vunpack.c.h.b16 %v150
    %v172 = vunpack.c.l.b16 %v151
    %v173 = vunpack.c.h.b16 %v151
    %v174 = vunpack.c.l.b16 %v152
    %v175 = vunpack.c.h.b16 %v152
    %v176 = vunpack.c.l.b16 %v153
    %v177 = vunpack.c.h.b16 %v153
    %v178 = vpack.c.b16 %v162, %v162
    %v179 = vpack.c.b16 %v163, %v163
    %v180 = vpack.c.b16 %v164, %v164
    %v181 = vpack.c.b16 %v165, %v165
    %v182 = vpack.c.b16 %v166, %v166
    %v183 = vpack.c.b16 %v167, %v167
    %v184 = vpack.c.b16 %v168, %v168
    %v185 = vpack.c.b16 %v169, %v169
    %v186 = vpack.c.b16 %v170, %v170
    %v187 = vpack.c.b16 %v171, %v171
    %v188 = vpack.c.b16 %v172, %v172
    %v189 = vpack.c.b16 %v173, %v173
    %v190 = vpack.c.b16 %v174, %v174
    %v191 = vpack.c.b16 %v175, %v175
    %v192 = vpack.c.b16 %v176, %v176
    %v193 = vpack.c.b16 %v177, %v177
    %210 = vst [vmem:[#allocation8] sm:$0xf] %v178
    %211 = vst [vmem:[#allocation8 + $0x4] sm:$0xf] %v179
    %212 = vst [vmem:[#allocation8 + $0x8] sm:$0xf] %v180
    %213 = vst [vmem:[#allocation8 + $0xc] sm:$0xf] %v181
    %214 = vst [vmem:[#allocation8 + $0x10] sm:$0xf] %v182
    %215 = vst [vmem:[#allocation8 + $0x14] sm:$0xf] %v183
    %216 = vst [vmem:[#allocation8 + $0x18] sm:$0xf] %v184
    %217 = vst [vmem:[#allocation8 + $0x1c] sm:$0xf] %v185
    %218 = vst [vmem:[#allocation8 + $0x20] sm:$0xf] %v186
    %219 = vst [vmem:[#allocation8 + $0x24] sm:$0xf] %v187
    %220 = vst [vmem:[#allocation8 + $0x28] sm:$0xf] %v188
    %221 = vst [vmem:[#allocation8 + $0x2c] sm:$0xf] %v189
    %222 = vst [vmem:[#allocation8 + $0x30] sm:$0xf] %v190
    %223 = vst [vmem:[#allocation8 + $0x34] sm:$0xf] %v191
    %224 = vst [vmem:[#allocation8 + $0x38] sm:$0xf] %v192
    %225 = vst [vmem:[#allocation8 + $0x3c] sm:$0xf] %v193
    // Predicated region
    $region26: #{block_group_forward.11} parent=1 // pred_check
      _
    $region27: #{block_group_forward.11} parent=1 // pred_check_branch
      %227 = sbr.rel (0) target = $region29
    $region28: #{block_group_forward.11} parent=1 // pred_region
      %s229 = ssub.s32 1024, 1024
      %230 = vsyncadd [#allocation4], %s229
      %s231 = sshll.u32 [#allocation8], 4
      %s232 = int_to_ptr.vmem [resolvable:$true] %s231
      %237 = dma.vmem_to_hbm [thread:$0]  %s232, 1024, %s3, [#allocation4], 64, 64, 4
    $region29: #{block_group_forward.11} parent=1 // pred_fallthru
      _
    // Predicated region
    $region30: #{block_group_forward.11} parent=1 // pred_check
      _
    $region31: #{block_group_forward.11} parent=1 // pred_check_branch
      %239 = sbr.rel (0) target = $region33
    $region32: #{block_group_forward.11} parent=1 // pred_region
      %240 = dma.done [#allocation4], 1024
    $region33: #{block_group_forward.11} parent=1 // pred_fallthru
      _
    %241 = vsyncpa [#allocation3], 1
    %242 = vsyncpa [#allocation6], 1
    %243 = vsyncpa [#allocation4], 1

// kernel: block_group_forward.10
$region0: #{block_group_forward.10}
  #allocation0 [shape = 'u32[]', space=smem, size = 0x4, offset = 0x4, fixed_abs, tag = 'smem constant byte address 0x4 - core index']
  #allocation1 [shape = 'u32[144,128]{1,0:T(1,128)}', space=vmem, size = 0x12000, scoped, tag = 'internal scratch']
  #allocation2 [shape = 'f32[128,128]{1,0:T(8,128)}', space=vmem, size = 0x10000, scoped, tag = 'scratch operand']
  %s0 = inlined_call_operand.hbm [shape: bf16[128,128], index: 0, kind: input, shape index: {}]
  %s1 = inlined_call_operand.hbm [shape: bf16[128,128], index: 1, kind: input, shape index: {}]
  %s2 = inlined_call_operand.hbm [shape: bf16[128,128], index: 2, kind: output, shape index: {0}]
  %s3 = inlined_call_operand.hbm [shape: f32[8,128], index: 3, kind: output, shape index: {1}]
  %4 = xla_tuple %s2, %s3
  %s5 = sld [smem:[#allocation0]]
  $region42: #{block_group_forward.10} parent=0
    _
  %s7 = ssub.s32 1, %s5
  %s8 = scalar_select 0, %s7, %s5
  $region1: #{block_group_forward.10} parent=0
    #allocation3 [shape = 'u8[32768]{0}', space=vmem, size = 0x8000, scoped, tag = 'input window, operand 0, single buffered']
    #allocation4 [shape = 's32[1]{0}', space=sflag, size = 0x4, scoped, tag = 'scoped memory for block_group_forward.10']
    #allocation5 [shape = 's32[1]{0}', space=sflag, size = 0x4, scoped, tag = 'scoped memory for block_group_forward.10']
    #allocation6 [shape = 'u8[32768]{0}', space=vmem, size = 0x8000, scoped, tag = 'input window, operand 1, single buffered']
    #allocation7 [shape = 's32[1]{0}', space=sflag, size = 0x4, scoped, tag = 'scoped memory for block_group_forward.10']
    #allocation8 [shape = 'u8[32768]{0}', space=vmem, size = 0x8000, scoped, tag = 'output window, operand 0, single buffered']
    #allocation9 [shape = 'u8[4096]{0}', space=vmem, size = 0x1000, scoped, tag = 'output window, operand 1, single buffered']
    #allocation10 [shape = 's32[1]{0}', space=sflag, size = 0x4, scoped, tag = 'scoped memory for block_group_forward.10']
    %9 = vsyncpa [#allocation4], 0
    %10 = vsyncpa [#allocation7], 0
    %11 = vsyncpa [#allocation5], 0
    %12 = vsyncpa [#allocation10], 0
    // Predicated region
    $region2: #{block_group_forward.10} parent=1 // pred_check
      _
    $region3: #{block_group_forward.10} parent=1 // pred_check_branch
      %14 = sbr.rel (0) target = $region5
    $region4: #{block_group_forward.10} parent=1 // pred_region
      %s16 = ssub.s32 1024, 1024
      %17 = vsyncadd [#allocation4], %s16
      %s18 = sshll.u32 [#allocation3], 4
      %s19 = int_to_ptr.vmem [resolvable:$true] %s18
      %24 = dma.hbm_to_vmem [thread:$0]  %s0, 1024, %s19, [#allocation4], 64, 64, 4
    $region5: #{block_group_forward.10} parent=1 // pred_fallthru
      _
    // Predicated region
    $region6: #{block_group_forward.10} parent=1 // pred_check
      _
    $region7: #{block_group_forward.10} parent=1 // pred_check_branch
      %26 = sbr.rel (0) target = $region9
    $region8: #{block_group_forward.10} parent=1 // pred_region
      %s28 = ssub.s32 1024, 1024
      %29 = vsyncadd [#allocation7], %s28
      %s30 = sshll.u32 [#allocation6], 4
      %s31 = int_to_ptr.vmem [resolvable:$true] %s30
      %36 = dma.hbm_to_vmem [thread:$0]  %s1, 1024, %s31, [#allocation7], 64, 64, 4
    $region9: #{block_group_forward.10} parent=1 // pred_fallthru
      _
    // Predicated region
    $region10: #{block_group_forward.10} parent=1 // pred_check
      _
    $region11: #{block_group_forward.10} parent=1 // pred_check_branch
      %38 = sbr.rel (0) target = $region13
    $region12: #{block_group_forward.10} parent=1 // pred_region
      %39 = dma.done [#allocation4], 1024
    $region13: #{block_group_forward.10} parent=1 // pred_fallthru
      _
    // Predicated region
    $region14: #{block_group_forward.10} parent=1 // pred_check
      _
    $region15: #{block_group_forward.10} parent=1 // pred_check_branch
      %41 = sbr.rel (0) target = $region17
    $region16: #{block_group_forward.10} parent=1 // pred_region
      %42 = dma.done [#allocation7], 1024
    $region17: #{block_group_forward.10} parent=1 // pred_fallthru
      _
    %p44 = scmp.eq.s32.totalorder 0, 0
    // Predicated region
    $region18: #{block_group_forward.10} parent=1 // pred_check
      %p45 = pneg %p44
    $region19: #{block_group_forward.10} parent=1 // pred_check_branch
      %47 = sbr.rel (%p45) target = $region21
    $region20: #{block_group_forward.10} parent=1 // pred_region
      %48 = vst [vmem:[#allocation2] sm:$0xff] 0.0
      %49 = vst [vmem:[#allocation2 + $0x8] sm:$0xff] 0.0
      %50 = vst [vmem:[#allocation2 + $0x10] sm:$0xff] 0.0
      %51 = vst [vmem:[#allocation2 + $0x18] sm:$0xff] 0.0
      %52 = vst [vmem:[#allocation2 + $0x20] sm:$0xff] 0.0
      %53 = vst [vmem:[#allocation2 + $0x28] sm:$0xff] 0.0
      %54 = vst [vmem:[#allocation2 + $0x30] sm:$0xff] 0.0
      %55 = vst [vmem:[#allocation2 + $0x38] sm:$0xff] 0.0
      %56 = vst [vmem:[#allocation2 + $0x40] sm:$0xff] 0.0
      %57 = vst [vmem:[#allocation2 + $0x48] sm:$0xff] 0.0
      %58 = vst [vmem:[#allocation2 + $0x50] sm:$0xff] 0.0
      %59 = vst [vmem:[#allocation2 + $0x58] sm:$0xff] 0.0
      %60 = vst [vmem:[#allocation2 + $0x60] sm:$0xff] 0.0
      %61 = vst [vmem:[#allocation2 + $0x68] sm:$0xff] 0.0
      %62 = vst [vmem:[#allocation2 + $0x70] sm:$0xff] 0.0
      %63 = vst [vmem:[#allocation2 + $0x78] sm:$0xff] 0.0
    $region21: #{block_group_forward.10} parent=1 // pred_fallthru
      _
    %s64 = smul.u32 0, 128
    %v65 = vld [vmem:[#allocation2] sm:$0xff]
    %v66 = vld [vmem:[#allocation2 + $0x8] sm:$0xff]
    %v67 = vld [vmem:[#allocation2 + $0x10] sm:$0xff]
    %v68 = vld [vmem:[#allocation2 + $0x18] sm:$0xff]
    %v69 = vld [vmem:[#allocation2 + $0x20] sm:$0xff]
    %v70 = vld [vmem:[#allocation2 + $0x28] sm:$0xff]
    %v71 = vld [vmem:[#allocation2 + $0x30] sm:$0xff]
    %v72 = vld [vmem:[#allocation2 + $0x38] sm:$0xff]
    %v73 = vld [vmem:[#allocation2 + $0x40] sm:$0xff]
    %v74 = vld [vmem:[#allocation2 + $0x48] sm:$0xff]
    %v75 = vld [vmem:[#allocation2 + $0x50] sm:$0xff]
    %v76 = vld [vmem:[#allocation2 + $0x58] sm:$0xff]
    %v77 = vld [vmem:[#allocation2 + $0x60] sm:$0xff]
    %v78 = vld [vmem:[#allocation2 + $0x68] sm:$0xff]
    %v79 = vld [vmem:[#allocation2 + $0x70] sm:$0xff]
    %v80 = vld [vmem:[#allocation2 + $0x78] sm:$0xff]
    %v81 = vld [vmem:[#allocation3] sm:$0xf]
    %v82 = vld [vmem:[#allocation3 + $0x4] sm:$0xf]
    %v83 = vld [vmem:[#allocation3 + $0x8] sm:$0xf]
    %v84 = vld [vmem:[#allocation3 + $0xc] sm:$0xf]
    %v85 = vld [vmem:[#allocation3 + $0x10] sm:$0xf]
    %v86 = vld [vmem:[#allocation3 + $0x14] sm:$0xf]
    %v87 = vld [vmem:[#allocation3 + $0x18] sm:$0xf]
    %v88 = vld [vmem:[#allocation3 + $0x1c] sm:$0xf]
    %v89 = vld [vmem:[#allocation3 + $0x20] sm:$0xf]
    %v90 = vld [vmem:[#allocation3 + $0x24] sm:$0xf]
    %v91 = vld [vmem:[#allocation3 + $0x28] sm:$0xf]
    %v92 = vld [vmem:[#allocation3 + $0x2c] sm:$0xf]
    %v93 = vld [vmem:[#allocation3 + $0x30] sm:$0xf]
    %v94 = vld [vmem:[#allocation3 + $0x34] sm:$0xf]
    %v95 = vld [vmem:[#allocation3 + $0x38] sm:$0xf]
    %v96 = vld [vmem:[#allocation3 + $0x3c] sm:$0xf]
    %s97 = sshra.s32 %s64, 3
    %s98 = sand.u32 %s64, 7
    %s99 = smul.addr %s97, 4
    %s100 = scalar_lea.vmem [#allocation6], %s99
    %v101 = vld [vmem:[%s100] sm:$0xf]
    %v102 = vld [vmem:[%s100 + $0x4] sm:$0xf]
    %v103 = vld [vmem:[%s100 + $0x8] sm:$0xf]
    %v104 = vld [vmem:[%s100 + $0xc] sm:$0xf]
    %v105 = vld [vmem:[%s100 + $0x10] sm:$0xf]
    %v106 = vld [vmem:[%s100 + $0x14] sm:$0xf]
    %v107 = vld [vmem:[%s100 + $0x18] sm:$0xf]
    %v108 = vld [vmem:[%s100 + $0x1c] sm:$0xf]
    %v109 = vld [vmem:[%s100 + $0x20] sm:$0xf]
    %v110 = vld [vmem:[%s100 + $0x24] sm:$0xf]
    %v111 = vld [vmem:[%s100 + $0x28] sm:$0xf]
    %v112 = vld [vmem:[%s100 + $0x2c] sm:$0xf]
    %v113 = vld [vmem:[%s100 + $0x30] sm:$0xf]
    %v114 = vld [vmem:[%s100 + $0x34] sm:$0xf]
    %v115 = vld [vmem:[%s100 + $0x38] sm:$0xf]
    %v116 = vld [vmem:[%s100 + $0x3c] sm:$0xf]
    %v133 = vunpack.c.l.b16 %v81
    %v134 = vunpack.c.l.b16 %v82
    %v135 = vunpack.c.l.b16 %v83
    %v136 = vunpack.c.l.b16 %v84
    %v137 = vunpack.c.l.b16 %v85
    %v138 = vunpack.c.l.b16 %v86
    %v139 = vunpack.c.l.b16 %v87
    %v140 = vunpack.c.l.b16 %v88
    %v141 = vunpack.c.l.b16 %v89
    %v142 = vunpack.c.l.b16 %v90
    %v143 = vunpack.c.l.b16 %v91
    %v144 = vunpack.c.l.b16 %v92
    %v145 = vunpack.c.l.b16 %v93
    %v146 = vunpack.c.l.b16 %v94
    %v147 = vunpack.c.l.b16 %v95
    %v148 = vunpack.c.l.b16 %v96
    %v149 = vpack.c.b16 %v134, %v133
    %v150 = vpack.c.b16 %v136, %v135
    %v151 = vpack.c.b16 %v138, %v137
    %v152 = vpack.c.b16 %v140, %v139
    %v153 = vpack.c.b16 %v142, %v141
    %v154 = vpack.c.b16 %v144, %v143
    %v155 = vpack.c.b16 %v146, %v145
    %v156 = vpack.c.b16 %v148, %v147
    %v181 = vunpack.c.l.b16 %v101
    %v182 = vunpack.c.l.b16 %v102
    %v183 = vunpack.c.l.b16 %v103
    %v184 = vunpack.c.l.b16 %v104
    %v185 = vunpack.c.l.b16 %v105
    %v186 = vunpack.c.l.b16 %v106
    %v187 = vunpack.c.l.b16 %v107
    %v188 = vunpack.c.l.b16 %v108
    %v189 = vunpack.c.l.b16 %v109
    %v190 = vunpack.c.l.b16 %v110
    %v191 = vunpack.c.l.b16 %v111
    %v192 = vunpack.c.l.b16 %v112
    %v193 = vunpack.c.l.b16 %v113
    %v194 = vunpack.c.l.b16 %v114
    %v195 = vunpack.c.l.b16 %v115
    %v196 = vunpack.c.l.b16 %v116
    %v197 = vpack.c.b16 %v182, %v181
    %v198 = vpack.c.b16 %v184, %v183
    %v199 = vpack.c.b16 %v186, %v185
    %v200 = vpack.c.b16 %v188, %v187
    %v201 = vpack.c.b16 %v190, %v189
    %v202 = vpack.c.b16 %v192, %v191
    %v203 = vpack.c.b16 %v194, %v193
    %v204 = vpack.c.b16 %v196, %v195
    %213 = vmatprep.subr.bf16.mxu0 0
    %214 = vmatpush1.bf16.msra.mxu0 %v197
    %215 = vmatprep.subr.bf16.mxu0 0
    %216 = vmatpush1.bf16.msra.mxu0 %v198
    %217 = vmatprep.subr.bf16.mxu0 0
    %218 = vmatpush1.bf16.msra.mxu0 %v199
    %219 = vmatprep.subr.bf16.mxu0 0
    %220 = vmatpush1.bf16.msra.mxu0 %v200
    %221 = vmatprep.subr.bf16.mxu0 0
    %222 = vmatpush1.bf16.msra.mxu0 %v201
    %223 = vmatprep.subr.bf16.mxu0 0
    %224 = vmatpush1.bf16.msra.mxu0 %v202
    %225 = vmatprep.subr.bf16.mxu0 0
    %226 = vmatpush1.bf16.msra.mxu0 %v203
    %227 = vmatprep.subr.bf16.mxu0 0
    %228 = vmatpush1.bf16.msra.mxu0 %v204
    %229 = vmatprep.subr.bf16.mxu0 0
    %230 = vmatpush1.bf16.msra.mxu0 0
    %231 = vmatprep.subr.bf16.mxu0 0
    %232 = vmatpush1.bf16.msra.mxu0 0
    %233 = vmatprep.subr.bf16.mxu0 0
    %234 = vmatpush1.bf16.msra.mxu0 0
    %235 = vmatprep.subr.bf16.mxu0 0
    %236 = vmatpush1.bf16.msra.mxu0 0
    %237 = vmatprep.subr.bf16.mxu0 0
    %238 = vmatpush1.bf16.msra.mxu0 0
    %239 = vmatprep.subr.bf16.mxu0 0
    %240 = vmatpush1.bf16.msra.mxu0 0
    %241 = vmatprep.subr.bf16.mxu0 0
    %242 = vmatpush1.bf16.msra.mxu0 0
    %243 = vmatprep.subr.bf16.mxu0 0
    %244 = vmatpush1.bf16.msra.mxu0 0
    %245 = vmatprep.mubr.bf16.mxu0 0
    %246 = vmatmul.mubr.bf16.gmra.mrb[0].mxu0 %v149
    %v247 = vpop.f32.mrb[0].mxu0
    %v248 = vadd.f32 0.0, %v247
    %v249 = vpop.f32.mrb[0].mxu0
    %v250 = vpop.f32.mrb[0].mxu0
    %v251 = vadd.f32 0.0, %v250
    %v252 = vpop.f32.mrb[0].mxu0
    %253 = vmatprep.mubr.bf16.mxu0 0
    %254 = vmatmul.mubr.bf16.gmra.mrb[0].mxu0 %v150
    %v255 = vpop.f32.mrb[0].mxu0
    %v256 = vadd.f32 0.0, %v255
    %v257 = vpop.f32.mrb[0].mxu0
    %v258 = vpop.f32.mrb[0].mxu0
    %v259 = vadd.f32 0.0, %v258
    %v260 = vpop.f32.mrb[0].mxu0
    %261 = vmatprep.mubr.bf16.mxu0 0
    %262 = vmatmul.mubr.bf16.gmra.mrb[0].mxu0 %v151
    %v263 = vpop.f32.mrb[0].mxu0
    %v264 = vadd.f32 0.0, %v263
    %v265 = vpop.f32.mrb[0].mxu0
    %v266 = vpop.f32.mrb[0].mxu0
    %v267 = vadd.f32 0.0, %v266
    %v268 = vpop.f32.mrb[0].mxu0
    %269 = vmatprep.mubr.bf16.mxu0 0
    %270 = vmatmul.mubr.bf16.gmra.mrb[0].mxu0 %v152
    %v271 = vpop.f32.mrb[0].mxu0
    %v272 = vadd.f32 0.0, %v271
    %v273 = vpop.f32.mrb[0].mxu0
    %v274 = vpop.f32.mrb[0].mxu0
    %v275 = vadd.f32 0.0, %v274
    %v276 = vpop.f32.mrb[0].mxu0
    %277 = vmatprep.mubr.bf16.mxu0 0
    %278 = vmatmul.mubr.bf16.gmra.mrb[0].mxu0 %v153
    %v279 = vpop.f32.mrb[0].mxu0
    %v280 = vadd.f32 0.0, %v279
    %v281 = vpop.f32.mrb[0].mxu0
    %v282 = vpop.f32.mrb[0].mxu0
    %v283 = vadd.f32 0.0, %v282
    %v284 = vpop.f32.mrb[0].mxu0
    %285 = vmatprep.mubr.bf16.mxu0 0
    %286 = vmatmul.mubr.bf16.gmra.mrb[0].mxu0 %v154
    %v287 = vpop.f32.mrb[0].mxu0
    %v288 = vadd.f32 0.0, %v287
    %v289 = vpop.f32.mrb[0].mxu0
    %v290 = vpop.f32.mrb[0].mxu0
    %v291 = vadd.f32 0.0, %v290
    %v292 = vpop.f32.mrb[0].mxu0
    %293 = vmatprep.mubr.bf16.mxu0 0
    %294 = vmatmul.mubr.bf16.gmra.mrb[0].mxu0 %v155
    %v295 = vpop.f32.mrb[0].mxu0
    %v296 = vadd.f32 0.0, %v295
    %v297 = vpop.f32.mrb[0].mxu0
    %v298 = vpop.f32.mrb[0].mxu0
    %v299 = vadd.f32 0.0, %v298
    %v300 = vpop.f32.mrb[0].mxu0
    %301 = vmatprep.mubr.bf16.mxu0 0
    %302 = vmatmul.mubr.bf16.gmra.mrb[0].mxu0 %v156
    %v303 = vpop.f32.mrb[0].mxu0
    %v304 = vadd.f32 0.0, %v303
    %v305 = vpop.f32.mrb[0].mxu0
    %v306 = vpop.f32.mrb[0].mxu0
    %v307 = vadd.f32 0.0, %v306
    %v308 = vpop.f32.mrb[0].mxu0
    %309 = vdwg.mxu0
    %v310 = vadd.f32 %v65, %v248
    %v311 = vadd.f32 %v66, %v251
    %v312 = vadd.f32 %v67, %v256
    %v313 = vadd.f32 %v68, %v259
    %v314 = vadd.f32 %v69, %v264
    %v315 = vadd.f32 %v70, %v267
    %v316 = vadd.f32 %v71, %v272
    %v317 = vadd.f32 %v72, %v275
    %v318 = vadd.f32 %v73, %v280
    %v319 = vadd.f32 %v74, %v283
    %v320 = vadd.f32 %v75, %v288
    %v321 = vadd.f32 %v76, %v291
    %v322 = vadd.f32 %v77, %v296
    %v323 = vadd.f32 %v78, %v299
    %v324 = vadd.f32 %v79, %v304
    %v325 = vadd.f32 %v80, %v307
    %326 = vst [vmem:[#allocation2] sm:$0xff] %v310
    %327 = vst [vmem:[#allocation2 + $0x8] sm:$0xff] %v311
    %328 = vst [vmem:[#allocation2 + $0x10] sm:$0xff] %v312
    %329 = vst [vmem:[#allocation2 + $0x18] sm:$0xff] %v313
    %330 = vst [vmem:[#allocation2 + $0x20] sm:$0xff] %v314
    %331 = vst [vmem:[#allocation2 + $0x28] sm:$0xff] %v315
    %332 = vst [vmem:[#allocation2 + $0x30] sm:$0xff] %v316
    %333 = vst [vmem:[#allocation2 + $0x38] sm:$0xff] %v317
    %334 = vst [vmem:[#allocation2 + $0x40] sm:$0xff] %v318
    %335 = vst [vmem:[#allocation2 + $0x48] sm:$0xff] %v319
    %336 = vst [vmem:[#allocation2 + $0x50] sm:$0xff] %v320
    %337 = vst [vmem:[#allocation2 + $0x58] sm:$0xff] %v321
    %338 = vst [vmem:[#allocation2 + $0x60] sm:$0xff] %v322
    %339 = vst [vmem:[#allocation2 + $0x68] sm:$0xff] %v323
    %340 = vst [vmem:[#allocation2 + $0x70] sm:$0xff] %v324
    %341 = vst [vmem:[#allocation2 + $0x78] sm:$0xff] %v325
    // Predicated region
    $region22: #{block_group_forward.10} parent=1 // pred_check
      %p342 = pneg %p44
    $region23: #{block_group_forward.10} parent=1 // pred_check_branch
      %344 = sbr.rel (%p342) target = $region25
    $region24: #{block_group_forward.10} parent=1 // pred_region
      %v345 = vld [vmem:[#allocation2] sm:$0xff]
      %v346 = vld [vmem:[#allocation2 + $0x8] sm:$0xff]
      %v347 = vld [vmem:[#allocation2 + $0x10] sm:$0xff]
      %v348 = vld [vmem:[#allocation2 + $0x18] sm:$0xff]
      %v349 = vld [vmem:[#allocation2 + $0x20] sm:$0xff]
      %v350 = vld [vmem:[#allocation2 + $0x28] sm:$0xff]
      %v351 = vld [vmem:[#allocation2 + $0x30] sm:$0xff]
      %v352 = vld [vmem:[#allocation2 + $0x38] sm:$0xff]
      %v353 = vld [vmem:[#allocation2 + $0x40] sm:$0xff]
      %v354 = vld [vmem:[#allocation2 + $0x48] sm:$0xff]
      %v355 = vld [vmem:[#allocation2 + $0x50] sm:$0xff]
      %v356 = vld [vmem:[#allocation2 + $0x58] sm:$0xff]
      %v357 = vld [vmem:[#allocation2 + $0x60] sm:$0xff]
      %v358 = vld [vmem:[#allocation2 + $0x68] sm:$0xff]
      %v359 = vld [vmem:[#allocation2 + $0x70] sm:$0xff]
      %v360 = vld [vmem:[#allocation2 + $0x78] sm:$0xff]
      %v361 = vpack.c.bf16 %v346, %v345
      %v362 = vpack.c.bf16 %v348, %v347
      %v363 = vpack.c.bf16 %v350, %v349
      %v364 = vpack.c.bf16 %v352, %v351
      %v365 = vpack.c.bf16 %v354, %v353
      %v366 = vpack.c.bf16 %v356, %v355
      %v367 = vpack.c.bf16 %v358, %v357
      %v368 = vpack.c.bf16 %v360, %v359
      %v377 = vunpack.c.l.b16 %v361
      %v378 = vunpack.c.h.b16 %v361
      %v379 = vunpack.c.l.b16 %v362
      %v380 = vunpack.c.h.b16 %v362
      %v381 = vunpack.c.l.b16 %v363
      %v382 = vunpack.c.h.b16 %v363
      %v383 = vunpack.c.l.b16 %v364
      %v384 = vunpack.c.h.b16 %v364
      %v385 = vunpack.c.l.b16 %v365
      %v386 = vunpack.c.h.b16 %v365
      %v387 = vunpack.c.l.b16 %v366
      %v388 = vunpack.c.h.b16 %v366
      %v389 = vunpack.c.l.b16 %v367
      %v390 = vunpack.c.h.b16 %v367
      %v391 = vunpack.c.l.b16 %v368
      %v392 = vunpack.c.h.b16 %v368
      %v393 = vpack.c.b16 %v377, %v377
      %v394 = vpack.c.b16 %v378, %v378
      %v395 = vpack.c.b16 %v379, %v379
      %v396 = vpack.c.b16 %v380, %v380
      %v397 = vpack.c.b16 %v381, %v381
      %v398 = vpack.c.b16 %v382, %v382
      %v399 = vpack.c.b16 %v383, %v383
      %v400 = vpack.c.b16 %v384, %v384
      %v401 = vpack.c.b16 %v385, %v385
      %v402 = vpack.c.b16 %v386, %v386
      %v403 = vpack.c.b16 %v387, %v387
      %v404 = vpack.c.b16 %v388, %v388
      %v405 = vpack.c.b16 %v389, %v389
      %v406 = vpack.c.b16 %v390, %v390
      %v407 = vpack.c.b16 %v391, %v391
      %v408 = vpack.c.b16 %v392, %v392
      %425 = vst [vmem:[#allocation8] sm:$0xf] %v393
      %426 = vst [vmem:[#allocation8 + $0x4] sm:$0xf] %v394
      %427 = vst [vmem:[#allocation8 + $0x8] sm:$0xf] %v395
      %428 = vst [vmem:[#allocation8 + $0xc] sm:$0xf] %v396
      %429 = vst [vmem:[#allocation8 + $0x10] sm:$0xf] %v397
      %430 = vst [vmem:[#allocation8 + $0x14] sm:$0xf] %v398
      %431 = vst [vmem:[#allocation8 + $0x18] sm:$0xf] %v399
      %432 = vst [vmem:[#allocation8 + $0x1c] sm:$0xf] %v400
      %433 = vst [vmem:[#allocation8 + $0x20] sm:$0xf] %v401
      %434 = vst [vmem:[#allocation8 + $0x24] sm:$0xf] %v402
      %435 = vst [vmem:[#allocation8 + $0x28] sm:$0xf] %v403
      %436 = vst [vmem:[#allocation8 + $0x2c] sm:$0xf] %v404
      %437 = vst [vmem:[#allocation8 + $0x30] sm:$0xf] %v405
      %438 = vst [vmem:[#allocation8 + $0x34] sm:$0xf] %v406
      %439 = vst [vmem:[#allocation8 + $0x38] sm:$0xf] %v407
      %440 = vst [vmem:[#allocation8 + $0x3c] sm:$0xf] %v408
      %v441 = vadd.f32 %v345, %v346
      %v442 = vadd.f32 %v441, %v347
      %v443 = vadd.f32 %v442, %v348
      %v444 = vadd.f32 %v443, %v349
      %v445 = vadd.f32 %v444, %v350
      %v446 = vadd.f32 %v445, %v351
      %v447 = vadd.f32 %v446, %v352
      %v448 = vadd.f32 %v447, %v353
      %v449 = vadd.f32 %v448, %v354
      %v450 = vadd.f32 %v449, %v355
      %v451 = vadd.f32 %v450, %v356
      %v452 = vadd.f32 %v451, %v357
      %v453 = vadd.f32 %v452, %v358
      %v454 = vadd.f32 %v453, %v359
      %v455 = vadd.f32 %v454, %v360
      %v456 = vrot.slane %v455, 4
      %v457 = vadd.f32 %v455, %v456
      %v458 = vrot.slane %v457, 2
      %v459 = vadd.f32 %v457, %v458
      %v460 = vrot.slane %v459, 1
      %v461 = vadd.f32 %v459, %v460
      %462 = vst [vmem:[#allocation9] sm:$0x1] %v461
      %v463 = vmul.f32 %v345, %v345
      %v464 = vmul.f32 %v346, %v346
      %v465 = vmul.f32 %v347, %v347
      %v466 = vmul.f32 %v348, %v348
      %v467 = vmul.f32 %v349, %v349
      %v468 = vmul.f32 %v350, %v350
      %v469 = vmul.f32 %v351, %v351
      %v470 = vmul.f32 %v352, %v352
      %v471 = vmul.f32 %v353, %v353
      %v472 = vmul.f32 %v354, %v354
      %v473 = vmul.f32 %v355, %v355
      %v474 = vmul.f32 %v356, %v356
      %v475 = vmul.f32 %v357, %v357
      %v476 = vmul.f32 %v358, %v358
      %v477 = vmul.f32 %v359, %v359
      %v478 = vmul.f32 %v360, %v360
      %v479 = vadd.f32 %v463, %v464
      %v480 = vadd.f32 %v479, %v465
      %v481 = vadd.f32 %v480, %v466
      %v482 = vadd.f32 %v481, %v467
      %v483 = vadd.f32 %v482, %v468
      %v484 = vadd.f32 %v483, %v469
      %v485 = vadd.f32 %v484, %v470
      %v486 = vadd.f32 %v485, %v471
      %v487 = vadd.f32 %v486, %v472
      %v488 = vadd.f32 %v487, %v473
      %v489 = vadd.f32 %v488, %v474
      %v490 = vadd.f32 %v489, %v475
      %v491 = vadd.f32 %v490, %v476
      %v492 = vadd.f32 %v491, %v477
      %v493 = vadd.f32 %v492, %v478
      %v494 = vrot.slane %v493, 4
      %v495 = vadd.f32 %v493, %v494
      %v496 = vrot.slane %v495, 2
      %v497 = vadd.f32 %v495, %v496
      %v498 = vrot.slane %v497, 1
      %v499 = vadd.f32 %v497, %v498
      %500 = vst [vmem:[#allocation9 + $0x1] sm:$0x1] %v499
    $region25: #{block_group_forward.10} parent=1 // pred_fallthru
      _
    // Predicated region
    $region26: #{block_group_forward.10} parent=1 // pred_check
      _
    $region27: #{block_group_forward.10} parent=1 // pred_check_branch
      %502 = sbr.rel (0) target = $region29
    $region28: #{block_group_forward.10} parent=1 // pred_region
      %s504 = ssub.s32 1024, 1024
      %505 = vsyncadd [#allocation5], %s504
      %s506 = sshll.u32 [#allocation8], 4
      %s507 = int_to_ptr.vmem [resolvable:$true] %s506
      %512 = dma.vmem_to_hbm [thread:$0]  %s507, 1024, %s2, [#allocation5], 64, 64, 4
    $region29: #{block_group_forward.10} parent=1 // pred_fallthru
      _
    // Predicated region
    $region30: #{block_group_forward.10} parent=1 // pred_check
      _
    $region31: #{block_group_forward.10} parent=1 // pred_check_branch
      %514 = sbr.rel (0) target = $region33
    $region32: #{block_group_forward.10} parent=1 // pred_region
      %s516 = ssub.s32 128, 128
      %517 = vsyncadd [#allocation10], %s516
      %s519 = sshll.u32 [#allocation9], 4
      %s520 = int_to_ptr.vmem [resolvable:$true] %s519
      %522 = dma.vmem_to_hbm [thread:$0]  %s520, 128, %s3, [#allocation10]
    $region33: #{block_group_forward.10} parent=1 // pred_fallthru
      _
    // Predicated region
    $region34: #{block_group_forward.10} parent=1 // pred_check
      _
    $region35: #{block_group_forward.10} parent=1 // pred_check_branch
      %524 = sbr.rel (0) target = $region37
    $region36: #{block_group_forward.10} parent=1 // pred_region
      %525 = dma.done [#allocation5], 1024
    $region37: #{block_group_forward.10} parent=1 // pred_fallthru
      _
    // Predicated region
    $region38: #{block_group_forward.10} parent=1 // pred_check
      _
    $region39: #{block_group_forward.10} parent=1 // pred_check_branch
      %527 = sbr.rel (0) target = $region41
    $region40: #{block_group_forward.10} parent=1 // pred_region
      %528 = dma.done [#allocation10], 128
    $region41: #{block_group_forward.10} parent=1 // pred_fallthru
      _
    %529 = vsyncpa [#allocation4], 1
    %530 = vsyncpa [#allocation7], 1
    %531 = vsyncpa [#allocation5], 1
    %532 = vsyncpa [#allocation10], 1

// kernel: block_group_forward.13
$region0: #{block_group_forward.13}
  #allocation0 [shape = 'u32[]', space=smem, size = 0x4, offset = 0x4, fixed_abs, tag = 'smem constant byte address 0x4 - core index']
  #allocation1 [shape = 'u32[144,128]{1,0:T(1,128)}', space=vmem, size = 0x12000, scoped, tag = 'internal scratch']
  %s0 = inlined_call_operand.hbm [shape: bf16[128,128], index: 0, kind: input, shape index: {}]
  %s1 = inlined_call_operand.hbm [shape: f32[1,128], index: 1, kind: input, shape index: {}]
  %s2 = inlined_call_operand.hbm [shape: f32[1,128], index: 2, kind: input, shape index: {}]
  %s3 = inlined_call_operand.hbm [shape: bf16[128,128], index: 3, kind: output, shape index: {}]
  %s4 = sld [smem:[#allocation0]]
  $region34: #{block_group_forward.13} parent=0
    _
  %s6 = ssub.s32 1, %s4
  %s7 = scalar_select 0, %s6, %s4
  $region1: #{block_group_forward.13} parent=0
    #allocation2 [shape = 'u8[32768]{0}', space=vmem, size = 0x8000, scoped, tag = 'input window, operand 0, single buffered']
    #allocation3 [shape = 's32[1]{0}', space=sflag, size = 0x4, scoped, tag = 'scoped memory for block_group_forward.13']
    #allocation4 [shape = 's32[1]{0}', space=sflag, size = 0x4, scoped, tag = 'scoped memory for block_group_forward.13']
    #allocation5 [shape = 'u8[512]{0}', space=vmem, size = 0x400, scoped, tag = 'input window, operand 1, single buffered']
    #allocation6 [shape = 's32[1]{0}', space=sflag, size = 0x4, scoped, tag = 'scoped memory for block_group_forward.13']
    #allocation7 [shape = 'u8[512]{0}', space=vmem, size = 0x400, scoped, tag = 'input window, operand 2, single buffered']
    #allocation8 [shape = 'u8[32768]{0}', space=vmem, size = 0x8000, scoped, tag = 'output window, operand 0, single buffered']
    %8 = vsyncpa [#allocation3], 0
    %9 = vsyncpa [#allocation6], 0
    %10 = vsyncpa [#allocation4], 0
    // Predicated region
    $region2: #{block_group_forward.13} parent=1 // pred_check
      _
    $region3: #{block_group_forward.13} parent=1 // pred_check_branch
      %12 = sbr.rel (0) target = $region5
    $region4: #{block_group_forward.13} parent=1 // pred_region
      %s14 = ssub.s32 1024, 1024
      %15 = vsyncadd [#allocation3], %s14
      %s16 = sshll.u32 [#allocation2], 4
      %s17 = int_to_ptr.vmem [resolvable:$true] %s16
      %22 = dma.hbm_to_vmem [thread:$0]  %s0, 1024, %s17, [#allocation3], 64, 64, 4
    $region5: #{block_group_forward.13} parent=1 // pred_fallthru
      _
    // Predicated region
    $region6: #{block_group_forward.13} parent=1 // pred_check
      _
    $region7: #{block_group_forward.13} parent=1 // pred_check_branch
      %24 = sbr.rel (0) target = $region9
    $region8: #{block_group_forward.13} parent=1 // pred_region
      %s26 = ssub.s32 16, 16
      %27 = vsyncadd [#allocation6], %s26
      %s29 = sshll.u32 [#allocation5], 4
      %s30 = int_to_ptr.vmem [resolvable:$true] %s29
      %32 = dma.hbm_to_vmem [thread:$0]  %s1, 16, %s30, [#allocation6]
    $region9: #{block_group_forward.13} parent=1 // pred_fallthru
      _
    // Predicated region
    $region10: #{block_group_forward.13} parent=1 // pred_check
      _
    $region11: #{block_group_forward.13} parent=1 // pred_check_branch
      %34 = sbr.rel (0) target = $region13
    $region12: #{block_group_forward.13} parent=1 // pred_region
      %s36 = ssub.s32 16, 16
      %37 = vsyncadd [#allocation6], %s36
      %s39 = sshll.u32 [#allocation7], 4
      %s40 = int_to_ptr.vmem [resolvable:$true] %s39
      %42 = dma.hbm_to_vmem [thread:$0]  %s2, 16, %s40, [#allocation6]
    $region13: #{block_group_forward.13} parent=1 // pred_fallthru
      _
    // Predicated region
    $region14: #{block_group_forward.13} parent=1 // pred_check
      _
    $region15: #{block_group_forward.13} parent=1 // pred_check_branch
      %44 = sbr.rel (0) target = $region17
    $region16: #{block_group_forward.13} parent=1 // pred_region
      %45 = dma.done [#allocation3], 1024
    $region17: #{block_group_forward.13} parent=1 // pred_fallthru
      _
    // Predicated region
    $region18: #{block_group_forward.13} parent=1 // pred_check
      _
    $region19: #{block_group_forward.13} parent=1 // pred_check_branch
      %47 = sbr.rel (0) target = $region21
    $region20: #{block_group_forward.13} parent=1 // pred_region
      %48 = dma.done [#allocation6], 16
    $region21: #{block_group_forward.13} parent=1 // pred_fallthru
      _
    // Predicated region
    $region22: #{block_group_forward.13} parent=1 // pred_check
      _
    $region23: #{block_group_forward.13} parent=1 // pred_check_branch
      %50 = sbr.rel (0) target = $region25
    $region24: #{block_group_forward.13} parent=1 // pred_region
      %51 = dma.done [#allocation6], 16
    $region25: #{block_group_forward.13} parent=1 // pred_fallthru
      _
    %v52 = vld [vmem:[#allocation2] sm:$0xf]
    %v53 = vld [vmem:[#allocation2 + $0x4] sm:$0xf]
    %v54 = vld [vmem:[#allocation2 + $0x8] sm:$0xf]
    %v55 = vld [vmem:[#allocation2 + $0xc] sm:$0xf]
    %v56 = vld [vmem:[#allocation2 + $0x10] sm:$0xf]
    %v57 = vld [vmem:[#allocation2 + $0x14] sm:$0xf]
    %v58 = vld [vmem:[#allocation2 + $0x18] sm:$0xf]
    %v59 = vld [vmem:[#allocation2 + $0x1c] sm:$0xf]
    %v60 = vld [vmem:[#allocation2 + $0x20] sm:$0xf]
    %v61 = vld [vmem:[#allocation2 + $0x24] sm:$0xf]
    %v62 = vld [vmem:[#allocation2 + $0x28] sm:$0xf]
    %v63 = vld [vmem:[#allocation2 + $0x2c] sm:$0xf]
    %v64 = vld [vmem:[#allocation2 + $0x30] sm:$0xf]
    %v65 = vld [vmem:[#allocation2 + $0x34] sm:$0xf]
    %v66 = vld [vmem:[#allocation2 + $0x38] sm:$0xf]
    %v67 = vld [vmem:[#allocation2 + $0x3c] sm:$0xf]
    %v68 = vunpack.c.l.bf16 %v52
    %v69 = vunpack.c.l.bf16 %v53
    %v70 = vunpack.c.l.bf16 %v54
    %v71 = vunpack.c.l.bf16 %v55
    %v72 = vunpack.c.l.bf16 %v56
    %v73 = vunpack.c.l.bf16 %v57
    %v74 = vunpack.c.l.bf16 %v58
    %v75 = vunpack.c.l.bf16 %v59
    %v76 = vunpack.c.l.bf16 %v60
    %v77 = vunpack.c.l.bf16 %v61
    %v78 = vunpack.c.l.bf16 %v62
    %v79 = vunpack.c.l.bf16 %v63
    %v80 = vunpack.c.l.bf16 %v64
    %v81 = vunpack.c.l.bf16 %v65
    %v82 = vunpack.c.l.bf16 %v66
    %v83 = vunpack.c.l.bf16 %v67
    %v84 = vld [vmem:[#allocation5] sm:$0x1]
    %v86 = vlaneseq
    %v87 = vshrl.u32 %v86, 7
    %v88 = vsub.s32 0, %v87
    %v89 = vrot.slane %v84, %v88
    %v91 = vmul.f32 %v68, %v89
    %v92 = vmul.f32 %v69, %v89
    %v93 = vmul.f32 %v70, %v89
    %v94 = vmul.f32 %v71, %v89
    %v95 = vmul.f32 %v72, %v89
    %v96 = vmul.f32 %v73, %v89
    %v97 = vmul.f32 %v74, %v89
    %v98 = vmul.f32 %v75, %v89
    %v99 = vmul.f32 %v76, %v89
    %v100 = vmul.f32 %v77, %v89
    %v101 = vmul.f32 %v78, %v89
    %v102 = vmul.f32 %v79, %v89
    %v103 = vmul.f32 %v80, %v89
    %v104 = vmul.f32 %v81, %v89
    %v105 = vmul.f32 %v82, %v89
    %v106 = vmul.f32 %v83, %v89
    %v107 = vld [vmem:[#allocation7] sm:$0x1]
    %v109 = vlaneseq
    %v110 = vshrl.u32 %v109, 7
    %v111 = vsub.s32 0, %v110
    %v112 = vrot.slane %v107, %v111
    %v114 = vadd.f32 %v91, %v112
    %v115 = vadd.f32 %v92, %v112
    %v116 = vadd.f32 %v93, %v112
    %v117 = vadd.f32 %v94, %v112
    %v118 = vadd.f32 %v95, %v112
    %v119 = vadd.f32 %v96, %v112
    %v120 = vadd.f32 %v97, %v112
    %v121 = vadd.f32 %v98, %v112
    %v122 = vadd.f32 %v99, %v112
    %v123 = vadd.f32 %v100, %v112
    %v124 = vadd.f32 %v101, %v112
    %v125 = vadd.f32 %v102, %v112
    %v126 = vadd.f32 %v103, %v112
    %v127 = vadd.f32 %v104, %v112
    %v128 = vadd.f32 %v105, %v112
    %v129 = vadd.f32 %v106, %v112
    %v130 = vpack.c.bf16 %v115, %v114
    %v131 = vpack.c.bf16 %v117, %v116
    %v132 = vpack.c.bf16 %v119, %v118
    %v133 = vpack.c.bf16 %v121, %v120
    %v134 = vpack.c.bf16 %v123, %v122
    %v135 = vpack.c.bf16 %v125, %v124
    %v136 = vpack.c.bf16 %v127, %v126
    %v137 = vpack.c.bf16 %v129, %v128
    %v146 = vunpack.c.l.b16 %v130
    %v147 = vunpack.c.h.b16 %v130
    %v148 = vunpack.c.l.b16 %v131
    %v149 = vunpack.c.h.b16 %v131
    %v150 = vunpack.c.l.b16 %v132
    %v151 = vunpack.c.h.b16 %v132
    %v152 = vunpack.c.l.b16 %v133
    %v153 = vunpack.c.h.b16 %v133
    %v154 = vunpack.c.l.b16 %v134
    %v155 = vunpack.c.h.b16 %v134
    %v156 = vunpack.c.l.b16 %v135
    %v157 = vunpack.c.h.b16 %v135
    %v158 = vunpack.c.l.b16 %v136
    %v159 = vunpack.c.h.b16 %v136
    %v160 = vunpack.c.l.b16 %v137
    %v161 = vunpack.c.h.b16 %v137
    %v162 = vpack.c.b16 %v146, %v146
    %v163 = vpack.c.b16 %v147, %v147
    %v164 = vpack.c.b16 %v148, %v148
    %v165 = vpack.c.b16 %v149, %v149
    %v166 = vpack.c.b16 %v150, %v150
    %v167 = vpack.c.b16 %v151, %v151
    %v168 = vpack.c.b16 %v152, %v152
    %v169 = vpack.c.b16 %v153, %v153
    %v170 = vpack.c.b16 %v154, %v154
    %v171 = vpack.c.b16 %v155, %v155
    %v172 = vpack.c.b16 %v156, %v156
    %v173 = vpack.c.b16 %v157, %v157
    %v174 = vpack.c.b16 %v158, %v158
    %v175 = vpack.c.b16 %v159, %v159
    %v176 = vpack.c.b16 %v160, %v160
    %v177 = vpack.c.b16 %v161, %v161
    %194 = vst [vmem:[#allocation8] sm:$0xf] %v162
    %195 = vst [vmem:[#allocation8 + $0x4] sm:$0xf] %v163
    %196 = vst [vmem:[#allocation8 + $0x8] sm:$0xf] %v164
    %197 = vst [vmem:[#allocation8 + $0xc] sm:$0xf] %v165
    %198 = vst [vmem:[#allocation8 + $0x10] sm:$0xf] %v166
    %199 = vst [vmem:[#allocation8 + $0x14] sm:$0xf] %v167
    %200 = vst [vmem:[#allocation8 + $0x18] sm:$0xf] %v168
    %201 = vst [vmem:[#allocation8 + $0x1c] sm:$0xf] %v169
    %202 = vst [vmem:[#allocation8 + $0x20] sm:$0xf] %v170
    %203 = vst [vmem:[#allocation8 + $0x24] sm:$0xf] %v171
    %204 = vst [vmem:[#allocation8 + $0x28] sm:$0xf] %v172
    %205 = vst [vmem:[#allocation8 + $0x2c] sm:$0xf] %v173
    %206 = vst [vmem:[#allocation8 + $0x30] sm:$0xf] %v174
    %207 = vst [vmem:[#allocation8 + $0x34] sm:$0xf] %v175
    %208 = vst [vmem:[#allocation8 + $0x38] sm:$0xf] %v176
    %209 = vst [vmem:[#allocation8 + $0x3c] sm:$0xf] %v177
    // Predicated region
    $region26: #{block_group_forward.13} parent=1 // pred_check
      _
    $region27: #{block_group_forward.13} parent=1 // pred_check_branch
      %211 = sbr.rel (0) target = $region29
    $region28: #{block_group_forward.13} parent=1 // pred_region
      %s213 = ssub.s32 1024, 1024
      %214 = vsyncadd [#allocation4], %s213
      %s215 = sshll.u32 [#allocation8], 4
      %s216 = int_to_ptr.vmem [resolvable:$true] %s215
      %221 = dma.vmem_to_hbm [thread:$0]  %s216, 1024, %s3, [#allocation4], 64, 64, 4
    $region29: #{block_group_forward.13} parent=1 // pred_fallthru
      _
    // Predicated region
    $region30: #{block_group_forward.13} parent=1 // pred_check
      _
    $region31: #{block_group_forward.13} parent=1 // pred_check_branch
      %223 = sbr.rel (0) target = $region33
    $region32: #{block_group_forward.13} parent=1 // pred_region
      %224 = dma.done [#allocation4], 1024
    $region33: #{block_group_forward.13} parent=1 // pred_fallthru
      _
    %225 = vsyncpa [#allocation3], 1
    %226 = vsyncpa [#allocation6], 1
    %227 = vsyncpa [#allocation4], 1

// kernel: block_group_forward.15
$region0: #{block_group_forward.15}
  #allocation0 [shape = 'u32[]', space=smem, size = 0x4, offset = 0x4, fixed_abs, tag = 'smem constant byte address 0x4 - core index']
  #allocation1 [shape = 'u32[144,128]{1,0:T(1,128)}', space=vmem, size = 0x12000, scoped, tag = 'internal scratch']
  %s0 = inlined_call_operand.hbm [shape: bf16[128,128], index: 0, kind: input, shape index: {}]
  %s1 = inlined_call_operand.hbm [shape: f32[1,128], index: 1, kind: input, shape index: {}]
  %s2 = inlined_call_operand.hbm [shape: f32[1,128], index: 2, kind: input, shape index: {}]
  %s3 = inlined_call_operand.hbm [shape: bf16[128,128], index: 3, kind: input, shape index: {}]
  %s4 = inlined_call_operand.hbm [shape: bf16[128,128], index: 4, kind: output, shape index: {}]
  %s5 = sld [smem:[#allocation0]]
  $region42: #{block_group_forward.15} parent=0
    _
  %s7 = ssub.s32 1, %s5
  %s8 = scalar_select 0, %s7, %s5
  $region1: #{block_group_forward.15} parent=0
    #allocation2 [shape = 'u8[32768]{0}', space=vmem, size = 0x8000, scoped, tag = 'input window, operand 0, single buffered']
    #allocation3 [shape = 's32[1]{0}', space=sflag, size = 0x4, scoped, tag = 'scoped memory for block_group_forward.15']
    #allocation4 [shape = 's32[1]{0}', space=sflag, size = 0x4, scoped, tag = 'scoped memory for block_group_forward.15']
    #allocation5 [shape = 'u8[512]{0}', space=vmem, size = 0x400, scoped, tag = 'input window, operand 1, single buffered']
    #allocation6 [shape = 's32[1]{0}', space=sflag, size = 0x4, scoped, tag = 'scoped memory for block_group_forward.15']
    #allocation7 [shape = 'u8[512]{0}', space=vmem, size = 0x400, scoped, tag = 'input window, operand 2, single buffered']
    #allocation8 [shape = 'u8[32768]{0}', space=vmem, size = 0x8000, scoped, tag = 'input window, operand 3, single buffered']
    #allocation9 [shape = 's32[1]{0}', space=sflag, size = 0x4, scoped, tag = 'scoped memory for block_group_forward.15']
    #allocation10 [shape = 'u8[32768]{0}', space=vmem, size = 0x8000, scoped, tag = 'output window, operand 0, single buffered']
    %9 = vsyncpa [#allocation3], 0
    %10 = vsyncpa [#allocation6], 0
    %11 = vsyncpa [#allocation9], 0
    %12 = vsyncpa [#allocation4], 0
    // Predicated region
    $region2: #{block_group_forward.15} parent=1 // pred_check
      _
    $region3: #{block_group_forward.15} parent=1 // pred_check_branch
      %14 = sbr.rel (0) target = $region5
    $region4: #{block_group_forward.15} parent=1 // pred_region
      %s16 = ssub.s32 1024, 1024
      %17 = vsyncadd [#allocation3], %s16
      %s18 = sshll.u32 [#allocation2], 4
      %s19 = int_to_ptr.vmem [resolvable:$true] %s18
      %24 = dma.hbm_to_vmem [thread:$0]  %s0, 1024, %s19, [#allocation3], 64, 64, 4
    $region5: #{block_group_forward.15} parent=1 // pred_fallthru
      _
    // Predicated region
    $region6: #{block_group_forward.15} parent=1 // pred_check
      _
    $region7: #{block_group_forward.15} parent=1 // pred_check_branch
      %26 = sbr.rel (0) target = $region9
    $region8: #{block_group_forward.15} parent=1 // pred_region
      %s28 = ssub.s32 16, 16
      %29 = vsyncadd [#allocation6], %s28
      %s31 = sshll.u32 [#allocation5], 4
      %s32 = int_to_ptr.vmem [resolvable:$true] %s31
      %34 = dma.hbm_to_vmem [thread:$0]  %s1, 16, %s32, [#allocation6]
    $region9: #{block_group_forward.15} parent=1 // pred_fallthru
      _
    // Predicated region
    $region10: #{block_group_forward.15} parent=1 // pred_check
      _
    $region11: #{block_group_forward.15} parent=1 // pred_check_branch
      %36 = sbr.rel (0) target = $region13
    $region12: #{block_group_forward.15} parent=1 // pred_region
      %s38 = ssub.s32 16, 16
      %39 = vsyncadd [#allocation6], %s38
      %s41 = sshll.u32 [#allocation7], 4
      %s42 = int_to_ptr.vmem [resolvable:$true] %s41
      %44 = dma.hbm_to_vmem [thread:$0]  %s2, 16, %s42, [#allocation6]
    $region13: #{block_group_forward.15} parent=1 // pred_fallthru
      _
    // Predicated region
    $region14: #{block_group_forward.15} parent=1 // pred_check
      _
    $region15: #{block_group_forward.15} parent=1 // pred_check_branch
      %46 = sbr.rel (0) target = $region17
    $region16: #{block_group_forward.15} parent=1 // pred_region
      %s48 = ssub.s32 1024, 1024
      %49 = vsyncadd [#allocation9], %s48
      %s50 = sshll.u32 [#allocation8], 4
      %s51 = int_to_ptr.vmem [resolvable:$true] %s50
      %56 = dma.hbm_to_vmem [thread:$0]  %s3, 1024, %s51, [#allocation9], 64, 64, 4
    $region17: #{block_group_forward.15} parent=1 // pred_fallthru
      _
    // Predicated region
    $region18: #{block_group_forward.15} parent=1 // pred_check
      _
    $region19: #{block_group_forward.15} parent=1 // pred_check_branch
      %58 = sbr.rel (0) target = $region21
    $region20: #{block_group_forward.15} parent=1 // pred_region
      %59 = dma.done [#allocation3], 1024
    $region21: #{block_group_forward.15} parent=1 // pred_fallthru
      _
    // Predicated region
    $region22: #{block_group_forward.15} parent=1 // pred_check
      _
    $region23: #{block_group_forward.15} parent=1 // pred_check_branch
      %61 = sbr.rel (0) target = $region25
    $region24: #{block_group_forward.15} parent=1 // pred_region
      %62 = dma.done [#allocation6], 16
    $region25: #{block_group_forward.15} parent=1 // pred_fallthru
      _
    // Predicated region
    $region26: #{block_group_forward.15} parent=1 // pred_check
      _
    $region27: #{block_group_forward.15} parent=1 // pred_check_branch
      %64 = sbr.rel (0) target = $region29
    $region28: #{block_group_forward.15} parent=1 // pred_region
      %65 = dma.done [#allocation6], 16
    $region29: #{block_group_forward.15} parent=1 // pred_fallthru
      _
    // Predicated region
    $region30: #{block_group_forward.15} parent=1 // pred_check
      _
    $region31: #{block_group_forward.15} parent=1 // pred_check_branch
      %67 = sbr.rel (0) target = $region33
    $region32: #{block_group_forward.15} parent=1 // pred_region
      %68 = dma.done [#allocation9], 1024
    $region33: #{block_group_forward.15} parent=1 // pred_fallthru
      _
    %v69 = vld [vmem:[#allocation2] sm:$0xf]
    %v70 = vld [vmem:[#allocation2 + $0x4] sm:$0xf]
    %v71 = vld [vmem:[#allocation2 + $0x8] sm:$0xf]
    %v72 = vld [vmem:[#allocation2 + $0xc] sm:$0xf]
    %v73 = vld [vmem:[#allocation2 + $0x10] sm:$0xf]
    %v74 = vld [vmem:[#allocation2 + $0x14] sm:$0xf]
    %v75 = vld [vmem:[#allocation2 + $0x18] sm:$0xf]
    %v76 = vld [vmem:[#allocation2 + $0x1c] sm:$0xf]
    %v77 = vld [vmem:[#allocation2 + $0x20] sm:$0xf]
    %v78 = vld [vmem:[#allocation2 + $0x24] sm:$0xf]
    %v79 = vld [vmem:[#allocation2 + $0x28] sm:$0xf]
    %v80 = vld [vmem:[#allocation2 + $0x2c] sm:$0xf]
    %v81 = vld [vmem:[#allocation2 + $0x30] sm:$0xf]
    %v82 = vld [vmem:[#allocation2 + $0x34] sm:$0xf]
    %v83 = vld [vmem:[#allocation2 + $0x38] sm:$0xf]
    %v84 = vld [vmem:[#allocation2 + $0x3c] sm:$0xf]
    %v85 = vunpack.c.l.bf16 %v69
    %v86 = vunpack.c.l.bf16 %v70
    %v87 = vunpack.c.l.bf16 %v71
    %v88 = vunpack.c.l.bf16 %v72
    %v89 = vunpack.c.l.bf16 %v73
    %v90 = vunpack.c.l.bf16 %v74
    %v91 = vunpack.c.l.bf16 %v75
    %v92 = vunpack.c.l.bf16 %v76
    %v93 = vunpack.c.l.bf16 %v77
    %v94 = vunpack.c.l.bf16 %v78
    %v95 = vunpack.c.l.bf16 %v79
    %v96 = vunpack.c.l.bf16 %v80
    %v97 = vunpack.c.l.bf16 %v81
    %v98 = vunpack.c.l.bf16 %v82
    %v99 = vunpack.c.l.bf16 %v83
    %v100 = vunpack.c.l.bf16 %v84
    %v101 = vld [vmem:[#allocation5] sm:$0x1]
    %v103 = vlaneseq
    %v104 = vshrl.u32 %v103, 7
    %v105 = vsub.s32 0, %v104
    %v106 = vrot.slane %v101, %v105
    %v108 = vmul.f32 %v85, %v106
    %v109 = vmul.f32 %v86, %v106
    %v110 = vmul.f32 %v87, %v106
    %v111 = vmul.f32 %v88, %v106
    %v112 = vmul.f32 %v89, %v106
    %v113 = vmul.f32 %v90, %v106
    %v114 = vmul.f32 %v91, %v106
    %v115 = vmul.f32 %v92, %v106
    %v116 = vmul.f32 %v93, %v106
    %v117 = vmul.f32 %v94, %v106
    %v118 = vmul.f32 %v95, %v106
    %v119 = vmul.f32 %v96, %v106
    %v120 = vmul.f32 %v97, %v106
    %v121 = vmul.f32 %v98, %v106
    %v122 = vmul.f32 %v99, %v106
    %v123 = vmul.f32 %v100, %v106
    %v124 = vld [vmem:[#allocation7] sm:$0x1]
    %v126 = vlaneseq
    %v127 = vshrl.u32 %v126, 7
    %v128 = vsub.s32 0, %v127
    %v129 = vrot.slane %v124, %v128
    %v131 = vadd.f32 %v108, %v129
    %v132 = vadd.f32 %v109, %v129
    %v133 = vadd.f32 %v110, %v129
    %v134 = vadd.f32 %v111, %v129
    %v135 = vadd.f32 %v112, %v129
    %v136 = vadd.f32 %v113, %v129
    %v137 = vadd.f32 %v114, %v129
    %v138 = vadd.f32 %v115, %v129
    %v139 = vadd.f32 %v116, %v129
    %v140 = vadd.f32 %v117, %v129
    %v141 = vadd.f32 %v118, %v129
    %v142 = vadd.f32 %v119, %v129
    %v143 = vadd.f32 %v120, %v129
    %v144 = vadd.f32 %v121, %v129
    %v145 = vadd.f32 %v122, %v129
    %v146 = vadd.f32 %v123, %v129
    %v147 = vld [vmem:[#allocation8] sm:$0xf]
    %v148 = vld [vmem:[#allocation8 + $0x4] sm:$0xf]
    %v149 = vld [vmem:[#allocation8 + $0x8] sm:$0xf]
    %v150 = vld [vmem:[#allocation8 + $0xc] sm:$0xf]
    %v151 = vld [vmem:[#allocation8 + $0x10] sm:$0xf]
    %v152 = vld [vmem:[#allocation8 + $0x14] sm:$0xf]
    %v153 = vld [vmem:[#allocation8 + $0x18] sm:$0xf]
    %v154 = vld [vmem:[#allocation8 + $0x1c] sm:$0xf]
    %v155 = vld [vmem:[#allocation8 + $0x20] sm:$0xf]
    %v156 = vld [vmem:[#allocation8 + $0x24] sm:$0xf]
    %v157 = vld [vmem:[#allocation8 + $0x28] sm:$0xf]
    %v158 = vld [vmem:[#allocation8 + $0x2c] sm:$0xf]
    %v159 = vld [vmem:[#allocation8 + $0x30] sm:$0xf]
    %v160 = vld [vmem:[#allocation8 + $0x34] sm:$0xf]
    %v161 = vld [vmem:[#allocation8 + $0x38] sm:$0xf]
    %v162 = vld [vmem:[#allocation8 + $0x3c] sm:$0xf]
    %v163 = vunpack.c.l.bf16 %v147
    %v164 = vunpack.c.l.bf16 %v148
    %v165 = vunpack.c.l.bf16 %v149
    %v166 = vunpack.c.l.bf16 %v150
    %v167 = vunpack.c.l.bf16 %v151
    %v168 = vunpack.c.l.bf16 %v152
    %v169 = vunpack.c.l.bf16 %v153
    %v170 = vunpack.c.l.bf16 %v154
    %v171 = vunpack.c.l.bf16 %v155
    %v172 = vunpack.c.l.bf16 %v156
    %v173 = vunpack.c.l.bf16 %v157
    %v174 = vunpack.c.l.bf16 %v158
    %v175 = vunpack.c.l.bf16 %v159
    %v176 = vunpack.c.l.bf16 %v160
    %v177 = vunpack.c.l.bf16 %v161
    %v178 = vunpack.c.l.bf16 %v162
    %v179 = vadd.f32 %v131, %v163
    %v180 = vadd.f32 %v132, %v164
    %v181 = vadd.f32 %v133, %v165
    %v182 = vadd.f32 %v134, %v166
    %v183 = vadd.f32 %v135, %v167
    %v184 = vadd.f32 %v136, %v168
    %v185 = vadd.f32 %v137, %v169
    %v186 = vadd.f32 %v138, %v170
    %v187 = vadd.f32 %v139, %v171
    %v188 = vadd.f32 %v140, %v172
    %v189 = vadd.f32 %v141, %v173
    %v190 = vadd.f32 %v142, %v174
    %v191 = vadd.f32 %v143, %v175
    %v192 = vadd.f32 %v144, %v176
    %v193 = vadd.f32 %v145, %v177
    %v194 = vadd.f32 %v146, %v178
    %v195 = vmax.f32 %v179, 0.0
    %v196 = vmax.f32 %v180, 0.0
    %v197 = vmax.f32 %v181, 0.0
    %v198 = vmax.f32 %v182, 0.0
    %v199 = vmax.f32 %v183, 0.0
    %v200 = vmax.f32 %v184, 0.0
    %v201 = vmax.f32 %v185, 0.0
    %v202 = vmax.f32 %v186, 0.0
    %v203 = vmax.f32 %v187, 0.0
    %v204 = vmax.f32 %v188, 0.0
    %v205 = vmax.f32 %v189, 0.0
    %v206 = vmax.f32 %v190, 0.0
    %v207 = vmax.f32 %v191, 0.0
    %v208 = vmax.f32 %v192, 0.0
    %v209 = vmax.f32 %v193, 0.0
    %v210 = vmax.f32 %v194, 0.0
    %v211 = vpack.c.bf16 %v196, %v195
    %v212 = vpack.c.bf16 %v198, %v197
    %v213 = vpack.c.bf16 %v200, %v199
    %v214 = vpack.c.bf16 %v202, %v201
    %v215 = vpack.c.bf16 %v204, %v203
    %v216 = vpack.c.bf16 %v206, %v205
    %v217 = vpack.c.bf16 %v208, %v207
    %v218 = vpack.c.bf16 %v210, %v209
    %v227 = vunpack.c.l.b16 %v211
    %v228 = vunpack.c.h.b16 %v211
    %v229 = vunpack.c.l.b16 %v212
    %v230 = vunpack.c.h.b16 %v212
    %v231 = vunpack.c.l.b16 %v213
    %v232 = vunpack.c.h.b16 %v213
    %v233 = vunpack.c.l.b16 %v214
    %v234 = vunpack.c.h.b16 %v214
    %v235 = vunpack.c.l.b16 %v215
    %v236 = vunpack.c.h.b16 %v215
    %v237 = vunpack.c.l.b16 %v216
    %v238 = vunpack.c.h.b16 %v216
    %v239 = vunpack.c.l.b16 %v217
    %v240 = vunpack.c.h.b16 %v217
    %v241 = vunpack.c.l.b16 %v218
    %v242 = vunpack.c.h.b16 %v218
    %v243 = vpack.c.b16 %v227, %v227
    %v244 = vpack.c.b16 %v228, %v228
    %v245 = vpack.c.b16 %v229, %v229
    %v246 = vpack.c.b16 %v230, %v230
    %v247 = vpack.c.b16 %v231, %v231
    %v248 = vpack.c.b16 %v232, %v232
    %v249 = vpack.c.b16 %v233, %v233
    %v250 = vpack.c.b16 %v234, %v234
    %v251 = vpack.c.b16 %v235, %v235
    %v252 = vpack.c.b16 %v236, %v236
    %v253 = vpack.c.b16 %v237, %v237
    %v254 = vpack.c.b16 %v238, %v238
    %v255 = vpack.c.b16 %v239, %v239
    %v256 = vpack.c.b16 %v240, %v240
    %v257 = vpack.c.b16 %v241, %v241
    %v258 = vpack.c.b16 %v242, %v242
    %275 = vst [vmem:[#allocation10] sm:$0xf] %v243
    %276 = vst [vmem:[#allocation10 + $0x4] sm:$0xf] %v244
    %277 = vst [vmem:[#allocation10 + $0x8] sm:$0xf] %v245
    %278 = vst [vmem:[#allocation10 + $0xc] sm:$0xf] %v246
    %279 = vst [vmem:[#allocation10 + $0x10] sm:$0xf] %v247
    %280 = vst [vmem:[#allocation10 + $0x14] sm:$0xf] %v248
    %281 = vst [vmem:[#allocation10 + $0x18] sm:$0xf] %v249
    %282 = vst [vmem:[#allocation10 + $0x1c] sm:$0xf] %v250
    %283 = vst [vmem:[#allocation10 + $0x20] sm:$0xf] %v251
    %284 = vst [vmem:[#allocation10 + $0x24] sm:$0xf] %v252
    %285 = vst [vmem:[#allocation10 + $0x28] sm:$0xf] %v253
    %286 = vst [vmem:[#allocation10 + $0x2c] sm:$0xf] %v254
    %287 = vst [vmem:[#allocation10 + $0x30] sm:$0xf] %v255
    %288 = vst [vmem:[#allocation10 + $0x34] sm:$0xf] %v256
    %289 = vst [vmem:[#allocation10 + $0x38] sm:$0xf] %v257
    %290 = vst [vmem:[#allocation10 + $0x3c] sm:$0xf] %v258
    // Predicated region
    $region34: #{block_group_forward.15} parent=1 // pred_check
      _
    $region35: #{block_group_forward.15} parent=1 // pred_check_branch
      %292 = sbr.rel (0) target = $region37
    $region36: #{block_group_forward.15} parent=1 // pred_region
      %s294 = ssub.s32 1024, 1024
      %295 = vsyncadd [#allocation4], %s294
      %s296 = sshll.u32 [#allocation10], 4
      %s297 = int_to_ptr.vmem [resolvable:$true] %s296
      %302 = dma.vmem_to_hbm [thread:$0]  %s297, 1024, %s4, [#allocation4], 64, 64, 4
    $region37: #{block_group_forward.15} parent=1 // pred_fallthru
      _
    // Predicated region
    $region38: #{block_group_forward.15} parent=1 // pred_check
      _
    $region39: #{block_group_forward.15} parent=1 // pred_check_branch
      %304 = sbr.rel (0) target = $region41
    $region40: #{block_group_forward.15} parent=1 // pred_region
      %305 = dma.done [#allocation4], 1024
    $region41: #{block_group_forward.15} parent=1 // pred_fallthru
      _
    %306 = vsyncpa [#allocation3], 1
    %307 = vsyncpa [#allocation6], 1
    %308 = vsyncpa [#allocation9], 1
    %309 = vsyncpa [#allocation4], 1

</llo_original>
